<compile_context>
chip_gen: v7x
topology: tpu7x:2x2x1
jax: 0.10.0
libtpu: 0.0.40
codegen_flags: <defaults>
</compile_context>

<pallas_src>
import math

import jax
import jax.numpy as jnp
from jax import lax
from jax.experimental import pallas as pl
from jax.experimental.pallas import tpu as pltpu

# ---- small synthetic config (mirrors the BertConfig fields the module uses) ----
NUM_LAYERS = 2
HIDDEN = 32
NUM_HEADS = 4
HEAD_DIM = HIDDEN // NUM_HEADS
INTERMEDIATE = 64
LAYER_NORM_EPS = 1e-12
INIT_RANGE = 0.02
PRE_LAYERNORM = False   # post-LN path (norm_gamma / norm_beta are empty tensors in the module)


def _layer_norm(x, gamma, beta, eps=LAYER_NORM_EPS):
    mu = jnp.mean(x, axis=-1, keepdims=True)
    xc = x - mu
    var = jnp.mean(xc * xc, axis=-1, keepdims=True)
    return xc * lax.rsqrt(var + eps) * gamma + beta


def _gelu(x):
    c = math.sqrt(2.0 / math.pi)
    return 0.5 * x * (1.0 + jnp.tanh(c * (x + 0.044715 * x * x * x)))


def encoder_kernel(x_ref, mask_ref,
                   wqkv_ref, bqkv_ref, wB_ref, bB_ref, wC_ref, bC_ref,
                   wD_ref, bD_ref, gA_ref, baA_ref, gB_ref, baB_ref,
                   out_ref, hs_ref):
    """grid = (batch, layer). One post-LN transformer layer per step; hidden state for the current
    batch element stays resident in hs_ref across the (arbitrary) layer axis."""
    layer = pl.program_id(1)

    @pl.when(layer == 0)
    def _():
        hs_ref[...] = x_ref[0]          # seed the resident hidden-state slab for this batch element

    hs = hs_ref[...]                     # (S, H) f32
    mask = mask_ref[0]                   # (1, S) additive extended mask for this batch element
    hs_b = hs.astype(jnp.bfloat16)       # matmul-boundary cast; elementwise math stays f32

    # ---- fused QKV projection: one lane-dense (S,H) @ (H,3H) matmul, f32 accumulate ----
    qkv = jnp.dot(hs_b, wqkv_ref[layer], preferred_element_type=jnp.float32) + bqkv_ref[layer]

    # ---- multi-head self attention: static lane slices per head, per-head output-projection
    #      accumulation (== concat(ctx) @ W_B, but with no lane concatenation) ----
    wB_l = wB_ref[layer]                 # (H_in, H_out) bf16
    attn = jnp.zeros_like(hs)
    for h in range(NUM_HEADS):           # static unrolled loop
        lo = h * HEAD_DIM
        q = qkv[:, lo:lo + HEAD_DIM].astype(jnp.bfloat16)                       # scale folded in W_q
        k = qkv[:, HIDDEN + lo:HIDDEN + lo + HEAD_DIM].astype(jnp.bfloat16)
        v = qkv[:, 2 * HIDDEN + lo:2 * HIDDEN + lo + HEAD_DIM].astype(jnp.bfloat16)
        s = lax.dot_general(q, k, (((1,), (1,)), ((), ())),
                            preferred_element_type=jnp.float32) + mask          # (S, S) f32
        s = s - jnp.max(s, axis=-1, keepdims=True)
        p = jnp.exp(s)
        p = p * pl.reciprocal(jnp.sum(p, axis=-1, keepdims=True), approx=True)  # EUP slot
        ctx = jnp.dot(p.astype(jnp.bfloat16), v, preferred_element_type=jnp.float32)   # (S, HD)
        attn = attn + jnp.dot(ctx.astype(jnp.bfloat16), wB_l[lo:lo + HEAD_DIM, :],
                              preferred_element_type=jnp.float32)
    attn = attn + bB_ref[layer]

    hs1 = _layer_norm(hs + attn, gA_ref[layer], baA_ref[layer])        # attention-output LN (normA)

    # ---- FFN ----
    inter = _gelu(jnp.dot(hs1.astype(jnp.bfloat16), wC_ref[layer],
                          preferred_element_type=jnp.float32) + bC_ref[layer])
    ffn = jnp.dot(inter.astype(jnp.bfloat16), wD_ref[layer],
                  preferred_element_type=jnp.float32) + bD_ref[layer]
    hs2 = _layer_norm(hs1 + ffn, gB_ref[layer], baB_ref[layer])        # FFN-output LN (normB)

    hs_ref[...] = hs2                    # carry to next layer (stays in VMEM)
    out_ref[0, 0] = hs2.astype(out_ref.dtype)   # per-layer hidden state (for all_hidden_states)


def encoder_pallas(x, mask, p):
    """x: (B, S, H) f32; mask: (B, 1, S) additive f32; p: prepared params. Returns (L, B, S, H)."""
    B, S, H = x.shape
    L = p["wqkv"].shape[0]

    def resident(arr):
        # Constant-index full-array spec: DMA'd once, VMEM-resident for all grid steps.
        # TODO(synk): at real BERT sizes switch these to per-layer slab BlockSpecs (layer-indexed).
        n = arr.ndim
        return pl.BlockSpec(arr.shape, lambda b, l, _n=n: (0,) * _n)

    grid_spec = pltpu.PrefetchScalarGridSpec(
        num_scalar_prefetch=0,
        grid=(B, L),                                   # batch (parallel) x layer (arbitrary carry)
        in_specs=[
            pl.BlockSpec((1, S, H), lambda b, l: (b, 0, 0)),   # input slab, read at layer 0 only
            pl.BlockSpec((1, 1, S), lambda b, l: (b, 0, 0)),   # per-batch additive mask row
            resident(p["wqkv"]), resident(p["bqkv"]),
            resident(p["wB"]), resident(p["bB"]),
            resident(p["wC"]), resident(p["bC"]),
            resident(p["wD"]), resident(p["bD"]),
            resident(p["gA"]), resident(p["baA"]),
            resident(p["gB"]), resident(p["baB"]),
        ],
        out_specs=pl.BlockSpec((1, 1, S, H), lambda b, l: (l, b, 0, 0)),
        scratch_shapes=[pltpu.VMEM((S, H), jnp.float32)],       # resident per-batch hidden state
    )
    return pl.pallas_call(
        encoder_kernel,
        out_shape=jax.ShapeDtypeStruct((L, B, S, H), x.dtype),
        grid_spec=grid_spec,
        compiler_params=pltpu.CompilerParams(
            dimension_semantics=("parallel", "arbitrary"),      # batch axis feeds v7x's 2nd core
            vmem_limit_bytes=32 * 1024 * 1024),                 # explicit budget (v7x-safe)
    )(x, mask,
      p["wqkv"], p["bqkv"], p["wB"], p["bB"], p["wC"], p["bC"],
      p["wD"], p["bD"], p["gA"], p["baA"], p["gB"], p["baB"])


def prepare_params(params):
    """One-time host-side repack: transpose linears, fold 1/sqrt(d) into the Q columns,
    cast matmul weights to bf16 (biases / LN params stay f32 for f32 elementwise math)."""
    L, H, I, HD = NUM_LAYERS, HIDDEN, INTERMEDIATE, HEAD_DIM
    scale = 1.0 / math.sqrt(HD)
    col_scale = jnp.concatenate([jnp.full((H,), scale, jnp.float32),
                                 jnp.ones((2 * H,), jnp.float32)])            # scales Q columns only

    wqkv = (params["linearA_weight"].transpose(0, 2, 1) * col_scale[None, None, :]).astype(jnp.bfloat16)
    bqkv = (params["linearA_bias"] * col_scale[None, :]).reshape(L, 1, 3 * H).astype(jnp.float32)

    return {
        "wqkv": wqkv, "bqkv": bqkv,                                            # (L,H,3H) / (L,1,3H)
        "wB": params["linearB_weight"].transpose(0, 2, 1).astype(jnp.bfloat16),
        "bB": params["linearB_bias"].reshape(L, 1, H).astype(jnp.float32),
        "wC": params["linearC_weight"].transpose(0, 2, 1).astype(jnp.bfloat16),
        "bC": params["linearC_bias"].reshape(L, 1, I).astype(jnp.float32),
        "wD": params["linearD_weight"].transpose(0, 2, 1).astype(jnp.bfloat16),
        "bD": params["linearD_bias"].reshape(L, 1, H).astype(jnp.float32),
        "gA": params["normA_gamma"].reshape(L, 1, H), "baA": params["normA_beta"].reshape(L, 1, H),
        "gB": params["normB_gamma"].reshape(L, 1, H), "baB": params["normB_beta"].reshape(L, 1, H),
    }


@jax.jit
def ext_bert_encoder_forward(hidden_states, attention_mask, prepped):
    """Equivalent of ExtBertEncoder.forward in eval mode with output_hidden_states=True."""
    B, S, H = hidden_states.shape
    mask = attention_mask.reshape(B, 1, S).astype(jnp.float32)     # additive extended mask rows
    layer_out = encoder_pallas(hidden_states, mask, prepped)        # (L, B, S, H)
    sequence_output = layer_out[-1]
    all_hidden_states = (hidden_states,) + tuple(layer_out[l] for l in range(NUM_LAYERS))
    return sequence_output, all_hidden_states


def ext_bert_encoder_ref(hidden_states, attention_mask, params):
    """Pure-JAX f32 reference for correctness checking."""
    B, S, H = hidden_states.shape
    mask = attention_mask.reshape(B, 1, 1, S).astype(jnp.float32)
    hs = hidden_states
    for l in range(NUM_LAYERS):
        wA, bA = params["linearA_weight"][l], params["linearA_bias"][l]
        wB, bB = params["linearB_weight"][l], params["linearB_bias"][l]
        wC, bC = params["linearC_weight"][l], params["linearC_bias"][l]
        wD, bD = params["linearD_weight"][l], params["linearD_bias"][l]
        gA, baA = params["normA_gamma"][l], params["normA_beta"][l]
        gB, baB = params["normB_gamma"][l], params["normB_beta"][l]

        qkv = hs @ wA.T + bA                                   # (B,S,3H)
        q, k, v = jnp.split(qkv, 3, axis=-1)

        def heads(x):
            return x.reshape(B, S, NUM_HEADS, HEAD_DIM).transpose(0, 2, 1, 3)

        q, k, v = heads(q), heads(k), heads(v)
        s = jnp.einsum("bhqd,bhkd->bhqk", q, k) / math.sqrt(HEAD_DIM) + mask
        p = jax.nn.softmax(s, axis=-1)
        ctx = jnp.einsum("bhqk,bhkd->bhqd", p, v)
        ctx = ctx.transpose(0, 2, 1, 3).reshape(B, S, H)
        attn = ctx @ wB.T + bB
        hs1 = _layer_norm(hs + attn, gA, baA)
        ffn = _gelu(hs1 @ wC.T + bC) @ wD.T + bD
        hs = _layer_norm(hs1 + ffn, gB, baB)
    return hs


def init_params(key):
    """Deterministic init matching ExtBertEncoder.__init__ with init_parms=None."""
    ks = jax.random.split(key, 4)
    return {
        "normA_gamma": jnp.ones((NUM_LAYERS, HIDDEN), jnp.float32),
        "normA_beta": jnp.zeros((NUM_LAYERS, HIDDEN), jnp.float32),
        "normB_gamma": jnp.ones((NUM_LAYERS, HIDDEN), jnp.float32),
        "normB_beta": jnp.zeros((NUM_LAYERS, HIDDEN), jnp.float32),
        "linearA_weight": INIT_RANGE * jax.random.normal(ks[0], (NUM_LAYERS, 3 * HIDDEN, HIDDEN), jnp.float32),
        "linearA_bias": jnp.zeros((NUM_LAYERS, 3 * HIDDEN), jnp.float32),
        "linearB_weight": INIT_RANGE * jax.random.normal(ks[1], (NUM_LAYERS, HIDDEN, HIDDEN), jnp.float32),
        "linearB_bias": jnp.zeros((NUM_LAYERS, HIDDEN), jnp.float32),
        "linearC_weight": INIT_RANGE * jax.random.normal(ks[2], (NUM_LAYERS, INTERMEDIATE, HIDDEN), jnp.float32),
        "linearC_bias": jnp.zeros((NUM_LAYERS, INTERMEDIATE), jnp.float32),
        "linearD_weight": INIT_RANGE * jax.random.normal(ks[3], (NUM_LAYERS, HIDDEN, INTERMEDIATE), jnp.float32),
        "linearD_bias": jnp.zeros((NUM_LAYERS, HIDDEN), jnp.float32),
    }


if __name__ == "__main__":
    key = jax.random.PRNGKey(0)
    k_x, k_p = jax.random.split(key)
    B, S = 2, 8

    hidden_states = jax.random.normal(k_x, (B, S, HIDDEN), jnp.float32)
    # additive extended attention mask: mask out the last 2 tokens of batch element 1
    keep = jnp.ones((B, S), jnp.float32).at[1, -2:].set(0.0)
    attention_mask = (1.0 - keep)[:, None, None, :] * -10000.0   # (B,1,1,S)

    params = init_params(k_p)
    prepped = prepare_params(params)        # one-time weight repack (transpose, scale fold, bf16)

    seq_out, all_hs = ext_bert_encoder_forward(hidden_states, attention_mask, prepped)
    seq_out = jax.block_until_ready(seq_out)

    ref = ext_bert_encoder_ref(hidden_states, attention_mask, params)
    err = float(jnp.max(jnp.abs(seq_out - ref)))
    # Tolerance covers bf16 MXU operands + approximate softmax reciprocal (f32 reference).
    assert jnp.allclose(seq_out, ref, atol=5e-3, rtol=5e-3), f"max abs err {err}"
    # all_hidden_states sanity: last entry must equal sequence_output
    assert jnp.allclose(all_hs[-1], seq_out)
    assert len(all_hs) == NUM_LAYERS + 1

    print("KERNEL_OK")
</pallas_src>

<mosaic_0001>
module attributes {stable_mosaic.version = 11 : i64} {
  func.func @encoder_kernel(%arg0: i32, %arg1: i32, %arg2: memref<1x8x32xf32, #tpu.memory_space<vmem>>, %arg3: memref<1x1x8xf32, #tpu.memory_space<vmem>>, %arg4: memref<2x32x96xbf16, #tpu.memory_space<vmem>>, %arg5: memref<2x1x96xf32, #tpu.memory_space<vmem>>, %arg6: memref<2x32x32xbf16, #tpu.memory_space<vmem>>, %arg7: memref<2x1x32xf32, #tpu.memory_space<vmem>>, %arg8: memref<2x32x64xbf16, #tpu.memory_space<vmem>>, %arg9: memref<2x1x64xf32, #tpu.memory_space<vmem>>, %arg10: memref<2x64x32xbf16, #tpu.memory_space<vmem>>, %arg11: memref<2x1x32xf32, #tpu.memory_space<vmem>>, %arg12: memref<2x1x32xf32, #tpu.memory_space<vmem>>, %arg13: memref<2x1x32xf32, #tpu.memory_space<vmem>>, %arg14: memref<2x1x32xf32, #tpu.memory_space<vmem>>, %arg15: memref<2x1x32xf32, #tpu.memory_space<vmem>>, %arg16: memref<1x1x8x32xf32, #tpu.memory_space<vmem>>, %arg17: memref<8x32xf32, #tpu.memory_space<vmem>>) attributes {dimension_semantics = [#tpu.dimension_semantics<parallel>, #tpu.dimension_semantics<arbitrary>], iteration_bounds = array<i64: 2, 2>, scalar_prefetch = 0 : i64, scratch_operands = 1 : i64, tpu.core_type = #tpu.core_type<tc>, window_params = [{transform_indices = @transform_0, window_bounds = array<i64: 1, 8, 32>}, {transform_indices = @transform_1, window_bounds = array<i64: 1, 1, 8>}, {pipeline_mode = #tpu.pipeline_mode<synchronous>, transform_indices = @transform_2, window_bounds = array<i64: 2, 32, 96>}, {pipeline_mode = #tpu.pipeline_mode<synchronous>, transform_indices = @transform_3, window_bounds = array<i64: 2, 1, 96>}, {pipeline_mode = #tpu.pipeline_mode<synchronous>, transform_indices = @transform_4, window_bounds = array<i64: 2, 32, 32>}, {pipeline_mode = #tpu.pipeline_mode<synchronous>, transform_indices = @transform_5, window_bounds = array<i64: 2, 1, 32>}, {pipeline_mode = #tpu.pipeline_mode<synchronous>, transform_indices = @transform_6, window_bounds = array<i64: 2, 32, 64>}, {pipeline_mode = #tpu.pipeline_mode<synchronous>, transform_indices = @transform_7, window_bounds = array<i64: 2, 1, 64>}, {pipeline_mode = #tpu.pipeline_mode<synchronous>, transform_indices = @transform_8, window_bounds = array<i64: 2, 64, 32>}, {pipeline_mode = #tpu.pipeline_mode<synchronous>, transform_indices = @transform_9, window_bounds = array<i64: 2, 1, 32>}, {pipeline_mode = #tpu.pipeline_mode<synchronous>, transform_indices = @transform_10, window_bounds = array<i64: 2, 1, 32>}, {pipeline_mode = #tpu.pipeline_mode<synchronous>, transform_indices = @transform_11, window_bounds = array<i64: 2, 1, 32>}, {pipeline_mode = #tpu.pipeline_mode<synchronous>, transform_indices = @transform_12, window_bounds = array<i64: 2, 1, 32>}, {pipeline_mode = #tpu.pipeline_mode<synchronous>, transform_indices = @transform_13, window_bounds = array<i64: 2, 1, 32>}, {transform_indices = @transform_14, window_bounds = array<i64: 1, 1, 8, 32>}]} {
    %c0_i32 = arith.constant 0 : i32
    %0 = arith.cmpi eq, %arg1, %c0_i32 : i32
    %1 = arith.extui %0 : i1 to i32
    %c0_i32_0 = arith.constant 0 : i32
    %2 = arith.cmpi ne, %1, %c0_i32_0 : i32
    scf.if %2 {
      %c0_72 = arith.constant 0 : index
      %c0_73 = arith.constant 0 : index
      %c0_74 = arith.constant 0 : index
      %216 = vector.load %arg2[%c0_72, %c0_73, %c0_74] : memref<1x8x32xf32, #tpu.memory_space<vmem>>, vector<1x8x32xf32>
      %217 = vector.shape_cast %216 : vector<1x8x32xf32> to vector<8x32xf32>
      %c0_75 = arith.constant 0 : index
      %c0_76 = arith.constant 0 : index
      %218 = vector.load %arg17[%c0_75, %c0_76] : memref<8x32xf32, #tpu.memory_space<vmem>>, vector<8x32xf32>
      tpu.vector_store %arg17[%c0_75, %c0_76], %217 {strides = array<i32>} : memref<8x32xf32, #tpu.memory_space<vmem>>, vector<8x32xf32>,
    } else {
    }
    %c0 = arith.constant 0 : index
    %c0_1 = arith.constant 0 : index
    %3 = vector.load %arg17[%c0, %c0_1] : memref<8x32xf32, #tpu.memory_space<vmem>>, vector<8x32xf32>
    %c0_2 = arith.constant 0 : index
    %c0_3 = arith.constant 0 : index
    %c0_4 = arith.constant 0 : index
    %4 = vector.load %arg3[%c0_2, %c0_3, %c0_4] : memref<1x1x8xf32, #tpu.memory_space<vmem>>, vector<1x1x8xf32>
    %5 = vector.shape_cast %4 : vector<1x1x8xf32> to vector<1x8xf32>
    %6 = arith.truncf %3 : vector<8x32xf32> to vector<8x32xbf16>
    %7 = arith.index_cast %arg1 : i32 to index
    %c0_5 = arith.constant 0 : index
    %c0_6 = arith.constant 0 : index
    %8 = vector.load %arg4[%7, %c0_5, %c0_6] : memref<2x32x96xbf16, #tpu.memory_space<vmem>>, vector<1x32x96xbf16>
    %9 = vector.shape_cast %8 : vector<1x32x96xbf16> to vector<32x96xbf16>
    %cst = arith.constant dense<0.000000e+00> : vector<8x96xf32>
    %10 = tpu.matmul %6, %9, %cst {dimension_numbers = #tpu.dot_dimension_numbers<[1], [0], [0], [1], [0, 0, 1, 1], [], []>} : vector<8x32xbf16>, vector<32x96xbf16>, vector<8x96xf32> -> vector<8x96xf32>
    %11 = arith.index_cast %arg1 : i32 to index
    %c0_7 = arith.constant 0 : index
    %c0_8 = arith.constant 0 : index
    %12 = vector.load %arg5[%11, %c0_7, %c0_8] : memref<2x1x96xf32, #tpu.memory_space<vmem>>, vector<1x1x96xf32>
    %13 = vector.shape_cast %12 : vector<1x1x96xf32> to vector<1x96xf32>
    %14 = vector.broadcast %13 : vector<1x96xf32> to vector<8x96xf32>
    %15 = arith.addf %10, %14 : vector<8x96xf32>
    %16 = arith.index_cast %arg1 : i32 to index
    %c0_9 = arith.constant 0 : index
    %c0_10 = arith.constant 0 : index
    %17 = vector.load %arg6[%16, %c0_9, %c0_10] : memref<2x32x32xbf16, #tpu.memory_space<vmem>>, vector<1x32x32xbf16>
    %18 = vector.shape_cast %17 : vector<1x32x32xbf16> to vector<32x32xbf16>
    %cst_11 = arith.constant 0.000000e+00 : f32
    %19 = vector.broadcast %cst_11 : f32 to vector<8x32xf32>
    %20 = vector.extract_strided_slice %15 {offsets = [0, 0], sizes = [8, 8], strides = [1, 1]} : vector<8x96xf32> to vector<8x8xf32>
    %21 = arith.truncf %20 : vector<8x8xf32> to vector<8x8xbf16>
    %22 = vector.extract_strided_slice %15 {offsets = [0, 32], sizes = [8, 8], strides = [1, 1]} : vector<8x96xf32> to vector<8x8xf32>
    %23 = arith.truncf %22 : vector<8x8xf32> to vector<8x8xbf16>
    %24 = vector.extract_strided_slice %15 {offsets = [0, 64], sizes = [8, 8], strides = [1, 1]} : vector<8x96xf32> to vector<8x8xf32>
    %25 = arith.truncf %24 : vector<8x8xf32> to vector<8x8xbf16>
    %cst_12 = arith.constant dense<0.000000e+00> : vector<8x8xf32>
    %26 = tpu.matmul %21, %23, %cst_12 {dimension_numbers = #tpu.dot_dimension_numbers<[1], [1], [0], [0], [0, 0, 1, 0], [], []>} : vector<8x8xbf16>, vector<8x8xbf16>, vector<8x8xf32> -> vector<8x8xf32>
    %27 = vector.broadcast %5 : vector<1x8xf32> to vector<8x8xf32>
    %28 = arith.addf %26, %27 : vector<8x8xf32>
    %cst_13 = arith.constant dense<0xFF800000> : vector<8xf32>
    %29 = vector.multi_reduction <maximumf>, %28, %cst_13 [1] : vector<8x8xf32> to vector<8xf32>
    %30 = vector.shape_cast %29 : vector<8xf32> to vector<8x1xf32>
    %31 = vector.broadcast %30 : vector<8x1xf32> to vector<8x8xf32>
    %32 = arith.subf %28, %31 : vector<8x8xf32>
    %33 = math.exp %32 : vector<8x8xf32>
    %cst_14 = arith.constant dense<0.000000e+00> : vector<8xf32>
    %34 = vector.multi_reduction <add>, %33, %cst_14 [1] : vector<8x8xf32> to vector<8xf32>
    %35 = vector.shape_cast %34 : vector<8xf32> to vector<8x1xf32>
    %36 = tpu.reciprocal %35 {approx = true} : vector<8x1xf32> -> vector<8x1xf32>
    %37 = vector.broadcast %36 : vector<8x1xf32> to vector<8x8xf32>
    %38 = arith.mulf %33, %37 : vector<8x8xf32>
    %39 = arith.truncf %38 : vector<8x8xf32> to vector<8x8xbf16>
    %cst_15 = arith.constant dense<0.000000e+00> : vector<8x8xf32>
    %40 = tpu.matmul %39, %25, %cst_15 {dimension_numbers = #tpu.dot_dimension_numbers<[1], [0], [0], [1], [0, 0, 1, 1], [], []>} : vector<8x8xbf16>, vector<8x8xbf16>, vector<8x8xf32> -> vector<8x8xf32>
    %41 = arith.truncf %40 : vector<8x8xf32> to vector<8x8xbf16>
    %42 = vector.extract_strided_slice %18 {offsets = [0, 0], sizes = [8, 32], strides = [1, 1]} : vector<32x32xbf16> to vector<8x32xbf16>
    %cst_16 = arith.constant dense<0.000000e+00> : vector<8x32xf32>
    %43 = tpu.matmul %41, %42, %cst_16 {dimension_numbers = #tpu.dot_dimension_numbers<[1], [0], [0], [1], [0, 0, 1, 1], [], []>} : vector<8x8xbf16>, vector<8x32xbf16>, vector<8x32xf32> -> vector<8x32xf32>
    %44 = arith.addf %19, %43 : vector<8x32xf32>
    %45 = vector.extract_strided_slice %15 {offsets = [0, 8], sizes = [8, 8], strides = [1, 1]} : vector<8x96xf32> to vector<8x8xf32>
    %46 = arith.truncf %45 : vector<8x8xf32> to vector<8x8xbf16>
    %47 = vector.extract_strided_slice %15 {offsets = [0, 40], sizes = [8, 8], strides = [1, 1]} : vector<8x96xf32> to vector<8x8xf32>
    %48 = arith.truncf %47 : vector<8x8xf32> to vector<8x8xbf16>
    %49 = vector.extract_strided_slice %15 {offsets = [0, 72], sizes = [8, 8], strides = [1, 1]} : vector<8x96xf32> to vector<8x8xf32>
    %50 = arith.truncf %49 : vector<8x8xf32> to vector<8x8xbf16>
    %cst_17 = arith.constant dense<0.000000e+00> : vector<8x8xf32>
    %51 = tpu.matmul %46, %48, %cst_17 {dimension_numbers = #tpu.dot_dimension_numbers<[1], [1], [0], [0], [0, 0, 1, 0], [], []>} : vector<8x8xbf16>, vector<8x8xbf16>, vector<8x8xf32> -> vector<8x8xf32>
    %52 = vector.broadcast %5 : vector<1x8xf32> to vector<8x8xf32>
    %53 = arith.addf %51, %52 : vector<8x8xf32>
    %cst_18 = arith.constant dense<0xFF800000> : vector<8xf32>
    %54 = vector.multi_reduction <maximumf>, %53, %cst_18 [1] : vector<8x8xf32> to vector<8xf32>
    %55 = vector.shape_cast %54 : vector<8xf32> to vector<8x1xf32>
    %56 = vector.broadcast %55 : vector<8x1xf32> to vector<8x8xf32>
    %57 = arith.subf %53, %56 : vector<8x8xf32>
    %58 = math.exp %57 : vector<8x8xf32>
    %cst_19 = arith.constant dense<0.000000e+00> : vector<8xf32>
    %59 = vector.multi_reduction <add>, %58, %cst_19 [1] : vector<8x8xf32> to vector<8xf32>
    %60 = vector.shape_cast %59 : vector<8xf32> to vector<8x1xf32>
    %61 = tpu.reciprocal %60 {approx = true} : vector<8x1xf32> -> vector<8x1xf32>
    %62 = vector.broadcast %61 : vector<8x1xf32> to vector<8x8xf32>
    %63 = arith.mulf %58, %62 : vector<8x8xf32>
    %64 = arith.truncf %63 : vector<8x8xf32> to vector<8x8xbf16>
    %cst_20 = arith.constant dense<0.000000e+00> : vector<8x8xf32>
    %65 = tpu.matmul %64, %50, %cst_20 {dimension_numbers = #tpu.dot_dimension_numbers<[1], [0], [0], [1], [0, 0, 1, 1], [], []>} : vector<8x8xbf16>, vector<8x8xbf16>, vector<8x8xf32> -> vector<8x8xf32>
    %66 = arith.truncf %65 : vector<8x8xf32> to vector<8x8xbf16>
    %67 = vector.extract_strided_slice %18 {offsets = [8, 0], sizes = [8, 32], strides = [1, 1]} : vector<32x32xbf16> to vector<8x32xbf16>
    %cst_21 = arith.constant dense<0.000000e+00> : vector<8x32xf32>
    %68 = tpu.matmul %66, %67, %cst_21 {dimension_numbers = #tpu.dot_dimension_numbers<[1], [0], [0], [1], [0, 0, 1, 1], [], []>} : vector<8x8xbf16>, vector<8x32xbf16>, vector<8x32xf32> -> vector<8x32xf32>
    %69 = arith.addf %44, %68 : vector<8x32xf32>
    %70 = vector.extract_strided_slice %15 {offsets = [0, 16], sizes = [8, 8], strides = [1, 1]} : vector<8x96xf32> to vector<8x8xf32>
    %71 = arith.truncf %70 : vector<8x8xf32> to vector<8x8xbf16>
    %72 = vector.extract_strided_slice %15 {offsets = [0, 48], sizes = [8, 8], strides = [1, 1]} : vector<8x96xf32> to vector<8x8xf32>
    %73 = arith.truncf %72 : vector<8x8xf32> to vector<8x8xbf16>
    %74 = vector.extract_strided_slice %15 {offsets = [0, 80], sizes = [8, 8], strides = [1, 1]} : vector<8x96xf32> to vector<8x8xf32>
    %75 = arith.truncf %74 : vector<8x8xf32> to vector<8x8xbf16>
    %cst_22 = arith.constant dense<0.000000e+00> : vector<8x8xf32>
    %76 = tpu.matmul %71, %73, %cst_22 {dimension_numbers = #tpu.dot_dimension_numbers<[1], [1], [0], [0], [0, 0, 1, 0], [], []>} : vector<8x8xbf16>, vector<8x8xbf16>, vector<8x8xf32> -> vector<8x8xf32>
    %77 = vector.broadcast %5 : vector<1x8xf32> to vector<8x8xf32>
    %78 = arith.addf %76, %77 : vector<8x8xf32>
    %cst_23 = arith.constant dense<0xFF800000> : vector<8xf32>
    %79 = vector.multi_reduction <maximumf>, %78, %cst_23 [1] : vector<8x8xf32> to vector<8xf32>
    %80 = vector.shape_cast %79 : vector<8xf32> to vector<8x1xf32>
    %81 = vector.broadcast %80 : vector<8x1xf32> to vector<8x8xf32>
    %82 = arith.subf %78, %81 : vector<8x8xf32>
    %83 = math.exp %82 : vector<8x8xf32>
    %cst_24 = arith.constant dense<0.000000e+00> : vector<8xf32>
    %84 = vector.multi_reduction <add>, %83, %cst_24 [1] : vector<8x8xf32> to vector<8xf32>
    %85 = vector.shape_cast %84 : vector<8xf32> to vector<8x1xf32>
    %86 = tpu.reciprocal %85 {approx = true} : vector<8x1xf32> -> vector<8x1xf32>
    %87 = vector.broadcast %86 : vector<8x1xf32> to vector<8x8xf32>
    %88 = arith.mulf %83, %87 : vector<8x8xf32>
    %89 = arith.truncf %88 : vector<8x8xf32> to vector<8x8xbf16>
    %cst_25 = arith.constant dense<0.000000e+00> : vector<8x8xf32>
    %90 = tpu.matmul %89, %75, %cst_25 {dimension_numbers = #tpu.dot_dimension_numbers<[1], [0], [0], [1], [0, 0, 1, 1], [], []>} : vector<8x8xbf16>, vector<8x8xbf16>, vector<8x8xf32> -> vector<8x8xf32>
    %91 = arith.truncf %90 : vector<8x8xf32> to vector<8x8xbf16>
    %92 = vector.extract_strided_slice %18 {offsets = [16, 0], sizes = [8, 32], strides = [1, 1]} : vector<32x32xbf16> to vector<8x32xbf16>
    %cst_26 = arith.constant dense<0.000000e+00> : vector<8x32xf32>
    %93 = tpu.matmul %91, %92, %cst_26 {dimension_numbers = #tpu.dot_dimension_numbers<[1], [0], [0], [1], [0, 0, 1, 1], [], []>} : vector<8x8xbf16>, vector<8x32xbf16>, vector<8x32xf32> -> vector<8x32xf32>
    %94 = arith.addf %69, %93 : vector<8x32xf32>
    %95 = vector.extract_strided_slice %15 {offsets = [0, 24], sizes = [8, 8], strides = [1, 1]} : vector<8x96xf32> to vector<8x8xf32>
    %96 = arith.truncf %95 : vector<8x8xf32> to vector<8x8xbf16>
    %97 = vector.extract_strided_slice %15 {offsets = [0, 56], sizes = [8, 8], strides = [1, 1]} : vector<8x96xf32> to vector<8x8xf32>
    %98 = arith.truncf %97 : vector<8x8xf32> to vector<8x8xbf16>
    %99 = vector.extract_strided_slice %15 {offsets = [0, 88], sizes = [8, 8], strides = [1, 1]} : vector<8x96xf32> to vector<8x8xf32>
    %100 = arith.truncf %99 : vector<8x8xf32> to vector<8x8xbf16>
    %cst_27 = arith.constant dense<0.000000e+00> : vector<8x8xf32>
    %101 = tpu.matmul %96, %98, %cst_27 {dimension_numbers = #tpu.dot_dimension_numbers<[1], [1], [0], [0], [0, 0, 1, 0], [], []>} : vector<8x8xbf16>, vector<8x8xbf16>, vector<8x8xf32> -> vector<8x8xf32>
    %102 = vector.broadcast %5 : vector<1x8xf32> to vector<8x8xf32>
    %103 = arith.addf %101, %102 : vector<8x8xf32>
    %cst_28 = arith.constant dense<0xFF800000> : vector<8xf32>
    %104 = vector.multi_reduction <maximumf>, %103, %cst_28 [1] : vector<8x8xf32> to vector<8xf32>
    %105 = vector.shape_cast %104 : vector<8xf32> to vector<8x1xf32>
    %106 = vector.broadcast %105 : vector<8x1xf32> to vector<8x8xf32>
    %107 = arith.subf %103, %106 : vector<8x8xf32>
    %108 = math.exp %107 : vector<8x8xf32>
    %cst_29 = arith.constant dense<0.000000e+00> : vector<8xf32>
    %109 = vector.multi_reduction <add>, %108, %cst_29 [1] : vector<8x8xf32> to vector<8xf32>
    %110 = vector.shape_cast %109 : vector<8xf32> to vector<8x1xf32>
    %111 = tpu.reciprocal %110 {approx = true} : vector<8x1xf32> -> vector<8x1xf32>
    %112 = vector.broadcast %111 : vector<8x1xf32> to vector<8x8xf32>
    %113 = arith.mulf %108, %112 : vector<8x8xf32>
    %114 = arith.truncf %113 : vector<8x8xf32> to vector<8x8xbf16>
    %cst_30 = arith.constant dense<0.000000e+00> : vector<8x8xf32>
    %115 = tpu.matmul %114, %100, %cst_30 {dimension_numbers = #tpu.dot_dimension_numbers<[1], [0], [0], [1], [0, 0, 1, 1], [], []>} : vector<8x8xbf16>, vector<8x8xbf16>, vector<8x8xf32> -> vector<8x8xf32>
    %116 = arith.truncf %115 : vector<8x8xf32> to vector<8x8xbf16>
    %117 = vector.extract_strided_slice %18 {offsets = [24, 0], sizes = [8, 32], strides = [1, 1]} : vector<32x32xbf16> to vector<8x32xbf16>
    %cst_31 = arith.constant dense<0.000000e+00> : vector<8x32xf32>
    %118 = tpu.matmul %116, %117, %cst_31 {dimension_numbers = #tpu.dot_dimension_numbers<[1], [0], [0], [1], [0, 0, 1, 1], [], []>} : vector<8x8xbf16>, vector<8x32xbf16>, vector<8x32xf32> -> vector<8x32xf32>
    %119 = arith.addf %94, %118 : vector<8x32xf32>
    %120 = arith.index_cast %arg1 : i32 to index
    %c0_32 = arith.constant 0 : index
    %c0_33 = arith.constant 0 : index
    %121 = vector.load %arg7[%120, %c0_32, %c0_33] : memref<2x1x32xf32, #tpu.memory_space<vmem>>, vector<1x1x32xf32>
    %122 = vector.shape_cast %121 : vector<1x1x32xf32> to vector<1x32xf32>
    %123 = vector.broadcast %122 : vector<1x32xf32> to vector<8x32xf32>
    %124 = arith.addf %119, %123 : vector<8x32xf32>
    %125 = arith.addf %3, %124 : vector<8x32xf32>
    %126 = arith.index_cast %arg1 : i32 to index
    %c0_34 = arith.constant 0 : index
    %c0_35 = arith.constant 0 : index
    %127 = vector.load %arg12[%126, %c0_34, %c0_35] : memref<2x1x32xf32, #tpu.memory_space<vmem>>, vector<1x1x32xf32>
    %128 = vector.shape_cast %127 : vector<1x1x32xf32> to vector<1x32xf32>
    %129 = arith.index_cast %arg1 : i32 to index
    %c0_36 = arith.constant 0 : index
    %c0_37 = arith.constant 0 : index
    %130 = vector.load %arg13[%129, %c0_36, %c0_37] : memref<2x1x32xf32, #tpu.memory_space<vmem>>, vector<1x1x32xf32>
    %131 = vector.shape_cast %130 : vector<1x1x32xf32> to vector<1x32xf32>
    %cst_38 = arith.constant dense<0.000000e+00> : vector<8xf32>
    %132 = vector.multi_reduction <add>, %125, %cst_38 [1] : vector<8x32xf32> to vector<8xf32>
    %133 = vector.shape_cast %132 : vector<8xf32> to vector<8x1xf32>
    %cst_39 = arith.constant 3.200000e+01 : f32
    %134 = vector.broadcast %cst_39 : f32 to vector<8x1xf32>
    %135 = arith.divf %133, %134 : vector<8x1xf32>
    %136 = vector.broadcast %135 : vector<8x1xf32> to vector<8x32xf32>
    %137 = arith.subf %125, %136 : vector<8x32xf32>
    %138 = arith.mulf %137, %137 : vector<8x32xf32>
    %cst_40 = arith.constant dense<0.000000e+00> : vector<8xf32>
    %139 = vector.multi_reduction <add>, %138, %cst_40 [1] : vector<8x32xf32> to vector<8xf32>
    %140 = vector.shape_cast %139 : vector<8xf32> to vector<8x1xf32>
    %cst_41 = arith.constant 3.200000e+01 : f32
    %141 = vector.broadcast %cst_41 : f32 to vector<8x1xf32>
    %142 = arith.divf %140, %141 : vector<8x1xf32>
    %cst_42 = arith.constant 9.99999996E-13 : f32
    %143 = vector.broadcast %cst_42 : f32 to vector<8x1xf32>
    %144 = arith.addf %142, %143 : vector<8x1xf32>
    %145 = math.rsqrt %144 : vector<8x1xf32>
    %146 = vector.broadcast %145 : vector<8x1xf32> to vector<8x32xf32>
    %147 = arith.mulf %137, %146 : vector<8x32xf32>
    %148 = vector.broadcast %128 : vector<1x32xf32> to vector<8x32xf32>
    %149 = arith.mulf %147, %148 : vector<8x32xf32>
    %150 = vector.broadcast %131 : vector<1x32xf32> to vector<8x32xf32>
    %151 = arith.addf %149, %150 : vector<8x32xf32>
    %152 = arith.truncf %151 : vector<8x32xf32> to vector<8x32xbf16>
    %153 = arith.index_cast %arg1 : i32 to index
    %c0_43 = arith.constant 0 : index
    %c0_44 = arith.constant 0 : index
    %154 = vector.load %arg8[%153, %c0_43, %c0_44] : memref<2x32x64xbf16, #tpu.memory_space<vmem>>, vector<1x32x64xbf16>
    %155 = vector.shape_cast %154 : vector<1x32x64xbf16> to vector<32x64xbf16>
    %cst_45 = arith.constant dense<0.000000e+00> : vector<8x64xf32>
    %156 = tpu.matmul %152, %155, %cst_45 {dimension_numbers = #tpu.dot_dimension_numbers<[1], [0], [0], [1], [0, 0, 1, 1], [], []>} : vector<8x32xbf16>, vector<32x64xbf16>, vector<8x64xf32> -> vector<8x64xf32>
    %157 = arith.index_cast %arg1 : i32 to index
    %c0_46 = arith.constant 0 : index
    %c0_47 = arith.constant 0 : index
    %158 = vector.load %arg9[%157, %c0_46, %c0_47] : memref<2x1x64xf32, #tpu.memory_space<vmem>>, vector<1x1x64xf32>
    %159 = vector.shape_cast %158 : vector<1x1x64xf32> to vector<1x64xf32>
    %160 = vector.broadcast %159 : vector<1x64xf32> to vector<8x64xf32>
    %161 = arith.addf %156, %160 : vector<8x64xf32>
    %cst_48 = arith.constant 5.000000e-01 : f32
    %162 = vector.broadcast %cst_48 : f32 to vector<8x64xf32>
    %163 = arith.mulf %162, %161 : vector<8x64xf32>
    %cst_49 = arith.constant 4.471500e-02 : f32
    %164 = vector.broadcast %cst_49 : f32 to vector<8x64xf32>
    %165 = arith.mulf %164, %161 : vector<8x64xf32>
    %166 = arith.mulf %165, %161 : vector<8x64xf32>
    %167 = arith.mulf %166, %161 : vector<8x64xf32>
    %168 = arith.addf %161, %167 : vector<8x64xf32>
    %cst_50 = arith.constant 0.797884583 : f32
    %169 = vector.broadcast %cst_50 : f32 to vector<8x64xf32>
    %170 = arith.mulf %169, %168 : vector<8x64xf32>
    %171 = math.tanh %170 : vector<8x64xf32>
    %cst_51 = arith.constant 1.000000e+00 : f32
    %172 = vector.broadcast %cst_51 : f32 to vector<8x64xf32>
    %173 = arith.addf %172, %171 : vector<8x64xf32>
    %174 = arith.mulf %163, %173 : vector<8x64xf32>
    %175 = arith.truncf %174 : vector<8x64xf32> to vector<8x64xbf16>
    %176 = arith.index_cast %arg1 : i32 to index
    %c0_52 = arith.constant 0 : index
    %c0_53 = arith.constant 0 : index
    %177 = vector.load %arg10[%176, %c0_52, %c0_53] : memref<2x64x32xbf16, #tpu.memory_space<vmem>>, vector<1x64x32xbf16>
    %178 = vector.shape_cast %177 : vector<1x64x32xbf16> to vector<64x32xbf16>
    %cst_54 = arith.constant dense<0.000000e+00> : vector<8x32xf32>
    %179 = tpu.matmul %175, %178, %cst_54 {dimension_numbers = #tpu.dot_dimension_numbers<[1], [0], [0], [1], [0, 0, 1, 1], [], []>} : vector<8x64xbf16>, vector<64x32xbf16>, vector<8x32xf32> -> vector<8x32xf32>
    %180 = arith.index_cast %arg1 : i32 to index
    %c0_55 = arith.constant 0 : index
    %c0_56 = arith.constant 0 : index
    %181 = vector.load %arg11[%180, %c0_55, %c0_56] : memref<2x1x32xf32, #tpu.memory_space<vmem>>, vector<1x1x32xf32>
    %182 = vector.shape_cast %181 : vector<1x1x32xf32> to vector<1x32xf32>
    %183 = vector.broadcast %182 : vector<1x32xf32> to vector<8x32xf32>
    %184 = arith.addf %179, %183 : vector<8x32xf32>
    %185 = arith.addf %151, %184 : vector<8x32xf32>
    %186 = arith.index_cast %arg1 : i32 to index
    %c0_57 = arith.constant 0 : index
    %c0_58 = arith.constant 0 : index
    %187 = vector.load %arg14[%186, %c0_57, %c0_58] : memref<2x1x32xf32, #tpu.memory_space<vmem>>, vector<1x1x32xf32>
    %188 = vector.shape_cast %187 : vector<1x1x32xf32> to vector<1x32xf32>
    %189 = arith.index_cast %arg1 : i32 to index
    %c0_59 = arith.constant 0 : index
    %c0_60 = arith.constant 0 : index
    %190 = vector.load %arg15[%189, %c0_59, %c0_60] : memref<2x1x32xf32, #tpu.memory_space<vmem>>, vector<1x1x32xf32>
    %191 = vector.shape_cast %190 : vector<1x1x32xf32> to vector<1x32xf32>
    %cst_61 = arith.constant dense<0.000000e+00> : vector<8xf32>
    %192 = vector.multi_reduction <add>, %185, %cst_61 [1] : vector<8x32xf32> to vector<8xf32>
    %193 = vector.shape_cast %192 : vector<8xf32> to vector<8x1xf32>
    %cst_62 = arith.constant 3.200000e+01 : f32
    %194 = vector.broadcast %cst_62 : f32 to vector<8x1xf32>
    %195 = arith.divf %193, %194 : vector<8x1xf32>
    %196 = vector.broadcast %195 : vector<8x1xf32> to vector<8x32xf32>
    %197 = arith.subf %185, %196 : vector<8x32xf32>
    %198 = arith.mulf %197, %197 : vector<8x32xf32>
    %cst_63 = arith.constant dense<0.000000e+00> : vector<8xf32>
    %199 = vector.multi_reduction <add>, %198, %cst_63 [1] : vector<8x32xf32> to vector<8xf32>
    %200 = vector.shape_cast %199 : vector<8xf32> to vector<8x1xf32>
    %cst_64 = arith.constant 3.200000e+01 : f32
    %201 = vector.broadcast %cst_64 : f32 to vector<8x1xf32>
    %202 = arith.divf %200, %201 : vector<8x1xf32>
    %cst_65 = arith.constant 9.99999996E-13 : f32
    %203 = vector.broadcast %cst_65 : f32 to vector<8x1xf32>
    %204 = arith.addf %202, %203 : vector<8x1xf32>
    %205 = math.rsqrt %204 : vector<8x1xf32>
    %206 = vector.broadcast %205 : vector<8x1xf32> to vector<8x32xf32>
    %207 = arith.mulf %197, %206 : vector<8x32xf32>
    %208 = vector.broadcast %188 : vector<1x32xf32> to vector<8x32xf32>
    %209 = arith.mulf %207, %208 : vector<8x32xf32>
    %210 = vector.broadcast %191 : vector<1x32xf32> to vector<8x32xf32>
    %211 = arith.addf %209, %210 : vector<8x32xf32>
    %c0_66 = arith.constant 0 : index
    %c0_67 = arith.constant 0 : index
    %212 = vector.load %arg17[%c0_66, %c0_67] : memref<8x32xf32, #tpu.memory_space<vmem>>, vector<8x32xf32>
    tpu.vector_store %arg17[%c0_66, %c0_67], %211 {strides = array<i32>} : memref<8x32xf32, #tpu.memory_space<vmem>>, vector<8x32xf32>,
    %c0_68 = arith.constant 0 : index
    %c0_69 = arith.constant 0 : index
    %c0_70 = arith.constant 0 : index
    %c0_71 = arith.constant 0 : index
    %213 = vector.load %arg16[%c0_68, %c0_69, %c0_70, %c0_71] : memref<1x1x8x32xf32, #tpu.memory_space<vmem>>, vector<1x1x8x32xf32>
    %214 = vector.shape_cast %213 : vector<1x1x8x32xf32> to vector<8x32xf32>
    %215 = vector.shape_cast %211 : vector<8x32xf32> to vector<1x1x8x32xf32>
    tpu.vector_store %arg16[%c0_68, %c0_69, %c0_70, %c0_71], %215 {strides = array<i32>} : memref<1x1x8x32xf32, #tpu.memory_space<vmem>>, vector<1x1x8x32xf32>,
    return
  }
  func.func @transform_0(%arg0: i32, %arg1: i32) -> (i32, i32, i32) {
    %c0_i32 = arith.constant 0 : i32
    %c0_i32_0 = arith.constant 0 : i32
    %c0_i32_1 = arith.constant 0 : i32
    return %arg0, %c0_i32, %c0_i32_0 : i32, i32, i32
  }
  func.func @transform_1(%arg0: i32, %arg1: i32) -> (i32, i32, i32) {
    %c0_i32 = arith.constant 0 : i32
    %c0_i32_0 = arith.constant 0 : i32
    %c0_i32_1 = arith.constant 0 : i32
    return %arg0, %c0_i32, %c0_i32_0 : i32, i32, i32
  }
  func.func @transform_2(%arg0: i32, %arg1: i32) -> (i32, i32, i32) {
    %c0_i32 = arith.constant 0 : i32
    %c0_i32_0 = arith.constant 0 : i32
    %c0_i32_1 = arith.constant 0 : i32
    %c0_i32_2 = arith.constant 0 : i32
    return %c0_i32, %c0_i32_0, %c0_i32_1 : i32, i32, i32
  }
  func.func @transform_3(%arg0: i32, %arg1: i32) -> (i32, i32, i32) {
    %c0_i32 = arith.constant 0 : i32
    %c0_i32_0 = arith.constant 0 : i32
    %c0_i32_1 = arith.constant 0 : i32
    %c0_i32_2 = arith.constant 0 : i32
    return %c0_i32, %c0_i32_0, %c0_i32_1 : i32, i32, i32
  }
  func.func @transform_4(%arg0: i32, %arg1: i32) -> (i32, i32, i32) {
    %c0_i32 = arith.constant 0 : i32
    %c0_i32_0 = arith.constant 0 : i32
    %c0_i32_1 = arith.constant 0 : i32
    %c0_i32_2 = arith.constant 0 : i32
    return %c0_i32, %c0_i32_0, %c0_i32_1 : i32, i32, i32
  }
  func.func @transform_5(%arg0: i32, %arg1: i32) -> (i32, i32, i32) {
    %c0_i32 = arith.constant 0 : i32
    %c0_i32_0 = arith.constant 0 : i32
    %c0_i32_1 = arith.constant 0 : i32
    %c0_i32_2 = arith.constant 0 : i32
    return %c0_i32, %c0_i32_0, %c0_i32_1 : i32, i32, i32
  }
  func.func @transform_6(%arg0: i32, %arg1: i32) -> (i32, i32, i32) {
    %c0_i32 = arith.constant 0 : i32
    %c0_i32_0 = arith.constant 0 : i32
    %c0_i32_1 = arith.constant 0 : i32
    %c0_i32_2 = arith.constant 0 : i32
    return %c0_i32, %c0_i32_0, %c0_i32_1 : i32, i32, i32
  }
  func.func @transform_7(%arg0: i32, %arg1: i32) -> (i32, i32, i32) {
    %c0_i32 = arith.constant 0 : i32
    %c0_i32_0 = arith.constant 0 : i32
    %c0_i32_1 = arith.constant 0 : i32
    %c0_i32_2 = arith.constant 0 : i32
    return %c0_i32, %c0_i32_0, %c0_i32_1 : i32, i32, i32
  }
  func.func @transform_8(%arg0: i32, %arg1: i32) -> (i32, i32, i32) {
    %c0_i32 = arith.constant 0 : i32
    %c0_i32_0 = arith.constant 0 : i32
    %c0_i32_1 = arith.constant 0 : i32
    %c0_i32_2 = arith.constant 0 : i32
    return %c0_i32, %c0_i32_0, %c0_i32_1 : i32, i32, i32
  }
  func.func @transform_9(%arg0: i32, %arg1: i32) -> (i32, i32, i32) {
    %c0_i32 = arith.constant 0 : i32
    %c0_i32_0 = arith.constant 0 : i32
    %c0_i32_1 = arith.constant 0 : i32
    %c0_i32_2 = arith.constant 0 : i32
    return %c0_i32, %c0_i32_0, %c0_i32_1 : i32, i32, i32
  }
  func.func @transform_10(%arg0: i32, %arg1: i32) -> (i32, i32, i32) {
    %c0_i32 = arith.constant 0 : i32
    %c0_i32_0 = arith.constant 0 : i32
    %c0_i32_1 = arith.constant 0 : i32
    %c0_i32_2 = arith.constant 0 : i32
    return %c0_i32, %c0_i32_0, %c0_i32_1 : i32, i32, i32
  }
  func.func @transform_11(%arg0: i32, %arg1: i32) -> (i32, i32, i32) {
    %c0_i32 = arith.constant 0 : i32
    %c0_i32_0 = arith.constant 0 : i32
    %c0_i32_1 = arith.constant 0 : i32
    %c0_i32_2 = arith.constant 0 : i32
    return %c0_i32, %c0_i32_0, %c0_i32_1 : i32, i32, i32
  }
  func.func @transform_12(%arg0: i32, %arg1: i32) -> (i32, i32, i32) {
    %c0_i32 = arith.constant 0 : i32
    %c0_i32_0 = arith.constant 0 : i32
    %c0_i32_1 = arith.constant 0 : i32
    %c0_i32_2 = arith.constant 0 : i32
    return %c0_i32, %c0_i32_0, %c0_i32_1 : i32, i32, i32
  }
  func.func @transform_13(%arg0: i32, %arg1: i32) -> (i32, i32, i32) {
    %c0_i32 = arith.constant 0 : i32
    %c0_i32_0 = arith.constant 0 : i32
    %c0_i32_1 = arith.constant 0 : i32
    %c0_i32_2 = arith.constant 0 : i32
    return %c0_i32, %c0_i32_0, %c0_i32_1 : i32, i32, i32
  }
  func.func @transform_14(%arg0: i32, %arg1: i32) -> (i32, i32, i32, i32) {
    %c0_i32 = arith.constant 0 : i32
    %c0_i32_0 = arith.constant 0 : i32
    %c0_i32_1 = arith.constant 0 : i32
    return %arg1, %arg0, %c0_i32, %c0_i32_0 : i32, i32, i32, i32
  }
}

</mosaic_0001>

<llo_original>
// kernel: ext_bert_encoder_forward.1
$region0: #{ext_bert_encoder_forward.1}
  #allocation0 [shape = 'u32[]', space=smem, size = 0x4, offset = 0x4, fixed_abs, tag = 'smem constant byte address 0x4 - core index']
  #allocation1 [shape = 'u32[144,128]{1,0:T(1,128)}', space=vmem, size = 0x12000, scoped, tag = 'internal scratch']
  #allocation2 [shape = 'f32[8,32]{1,0:T(8,128)}', space=vmem, size = 0x1000, scoped, tag = 'scratch operand']
  %s0 = inlined_call_operand.vmem [shape: f32[2,8,32], index: 0, kind: input, shape index: {}]
  %s1 = inlined_call_operand.vmem [shape: f32[2,1,8], index: 1, kind: input, shape index: {}]
  %s2 = inlined_call_operand.vmem [shape: bf16[2,32,96], index: 2, kind: input, shape index: {}]
  %s3 = inlined_call_operand.vmem [shape: f32[2,1,96], index: 3, kind: input, shape index: {}]
  %s4 = inlined_call_operand.vmem [shape: bf16[2,32,32], index: 4, kind: input, shape index: {}]
  %s5 = inlined_call_operand.vmem [shape: f32[2,1,32], index: 5, kind: input, shape index: {}]
  %s6 = inlined_call_operand.hbm [shape: bf16[2,32,64], index: 6, kind: input, shape index: {}]
  %s7 = inlined_call_operand.vmem [shape: f32[2,1,64], index: 7, kind: input, shape index: {}]
  %s8 = inlined_call_operand.vmem [shape: bf16[2,64,32], index: 8, kind: input, shape index: {}]
  %s9 = inlined_call_operand.vmem [shape: f32[2,1,32], index: 9, kind: input, shape index: {}]
  %s10 = inlined_call_operand.vmem [shape: f32[2,1,32], index: 10, kind: input, shape index: {}]
  %s11 = inlined_call_operand.vmem [shape: f32[2,1,32], index: 11, kind: input, shape index: {}]
  %s12 = inlined_call_operand.vmem [shape: f32[2,1,32], index: 12, kind: input, shape index: {}]
  %s13 = inlined_call_operand.vmem [shape: f32[2,1,32], index: 13, kind: input, shape index: {}]
  %s14 = inlined_call_operand.vmem [shape: f32[2,2,8,32], index: 14, kind: output, shape index: {}]
  %s15 = sld [smem:[#allocation0]]
  $region97: #{ext_bert_encoder_forward.1} parent=0
    _
  %s17 = ssub.s32 1, %s15
  %s18 = scalar_select 0, %s17, %s15
  $region1: #{ext_bert_encoder_forward.1} parent=0
    #allocation3 [shape = 'u8[16384]{0}', space=vmem, size = 0x4000, scoped, tag = 'input window, operand 6, single buffered']
    #allocation4 [shape = 's32[2]{0}', space=sflag, size = 0x8, scoped, tag = 'scoped memory for ext_bert_encoder_forward.1']
    %19 = vsyncpa [#allocation4], 0
    loop: start=0, step=1, limit=6
    $region2: #{ext_bert_encoder_forward.1} parent=1 // loop_pre_header
      _
    $region3: #{ext_bert_encoder_forward.1} parent=1 // loop_header
      %s21 = sphi 0, %s25
      %p22 = scmp.ge.s32.totalorder %s21, 6
      %s28 = sphi 0, %s40
      %s29 = sphi 0, %s36
      %s30 = sphi 0, %s28
      %s31 = sphi 0, %s29
      %s32 = sphi 0, %s30
      %s33 = sphi 0, %s31
      %s43 = sphi 0, %s45
      %s46 = sphi 0, %s43
      %s47 = sphi 0, %s46
      %s63 = sphi 0, %s47
      %s69 = sphi 0, %s71
      %s72 = sphi 0, %s69
      %s73 = sphi 0, %s72
      %s89 = sphi 0, %s73
      %s93 = sphi 0, %s93
      %s95 = sphi 0, %s93
      %s96 = sphi 0, %s95
      %s110 = sphi 0, %s96
      %s114 = sphi 0, %s114
      %s116 = sphi 0, %s114
      %s117 = sphi 0, %s116
      %s131 = sphi 0, %s117
      %s135 = sphi 0, %s135
      %s137 = sphi 0, %s135
      %s138 = sphi 0, %s137
      %s152 = sphi 0, %s138
      %s156 = sphi 0, %s156
      %s158 = sphi 0, %s156
      %s159 = sphi 0, %s158
      %s173 = sphi 0, %s159
      %s177 = sphi 0, %s177
      %s179 = sphi 0, %s177
      %s180 = sphi 0, %s179
      %s194 = sphi 0, %s180
      %s198 = sphi 0, %s198
      %s200 = sphi 0, %s198
      %s201 = sphi 0, %s200
      %s215 = sphi 0, %s201
      %s219 = sphi 0, %s219
      %s221 = sphi 0, %s219
      %s222 = sphi 0, %s221
      %s236 = sphi 0, %s222
      %s240 = sphi 0, %s240
      %s242 = sphi 0, %s240
      %s243 = sphi 0, %s242
      %s257 = sphi 0, %s243
      %s261 = sphi 0, %s261
      %s263 = sphi 0, %s261
      %s264 = sphi 0, %s263
      %s278 = sphi 0, %s264
      %s282 = sphi 0, %s282
      %s284 = sphi 0, %s282
      %s285 = sphi 0, %s284
      %s299 = sphi 0, %s285
      %s303 = sphi 0, %s303
      %s305 = sphi 0, %s303
      %s306 = sphi 0, %s305
      %s320 = sphi 0, %s306
      %s324 = sphi 0, %s324
      %s326 = sphi 0, %s324
      %s327 = sphi 0, %s326
      %s341 = sphi 0, %s327
      %s349 = sphi 0, %s351
      %s352 = sphi 0, %s349
      %s353 = sphi 0, %s352
      %s369 = sphi 0, %s353
    $region4: #{ext_bert_encoder_forward.1} parent=1 // loop_header_branch
      %24 = sbr.rel (%p22) target = $region8
    $region5: #{ext_bert_encoder_forward.1} parent=1 // loop_body
      %s26 = ssub.s32 %s21, 1
      %s27 = ssub.s32 %s21, 2
      %s34 = sadd.s32 1, %s29
      %p35 = scmp.ge.s32.totalorder %s34, 2
      %s36 = scalar_select %p35, 0, %s34
      %s37 = sadd.s32 1, %s28
      %s38 = scalar_select %p35, %s37, %s28
      %p39 = scmp.ge.s32.totalorder %s38, 2
      %s40 = scalar_select %p39, 0, %s38
      %s41 = ssub.s32 %s28, %s40
      %p42 = scmp.eq.s32.totalorder %s41, 0
      %s44 = sadd.s32 %s43, 1
      %s45 = scalar_select %p42, %s43, %s44
      %p48 = pneg %p42
      %p49 = scmp.eq.s32.totalorder %s21, 3
      %p50 = por %p48, %p49
      %p51 = scmp.ne.s32.totalorder %s43, %s46
      %p52 = scmp.eq.s32.totalorder %s21, 0
      %p53 = por %p51, %p52
      %p54 = scmp.ne.s32.totalorder %s43, %s46
      %p55 = scmp.eq.s32.totalorder %s26, 3
      %p56 = por %p54, %p55
      %p57 = scmp.ne.s32.totalorder %s46, %s47
      %p58 = scmp.eq.s32.totalorder %s26, 0
      %p59 = por %p57, %p58
      %p60 = scmp.ne.s32.totalorder %s46, %s47
      %p61 = scmp.eq.s32.totalorder %s27, 3
      %p62 = por %p60, %p61
      %p64 = scmp.ne.s32.totalorder %s47, %s63
      %p65 = scmp.eq.s32.totalorder %s27, 0
      %p66 = por %p64, %p65
      %s67 = ssub.s32 %s28, %s40
      %p68 = scmp.eq.s32.totalorder %s67, 0
      %s70 = sadd.s32 %s69, 1
      %s71 = scalar_select %p68, %s69, %s70
      %p74 = pneg %p68
      %p75 = scmp.eq.s32.totalorder %s21, 3
      %p76 = por %p74, %p75
      %p77 = scmp.ne.s32.totalorder %s69, %s72
      %p78 = scmp.eq.s32.totalorder %s21, 0
      %p79 = por %p77, %p78
      %p80 = scmp.ne.s32.totalorder %s69, %s72
      %p81 = scmp.eq.s32.totalorder %s26, 3
      %p82 = por %p80, %p81
      %p83 = scmp.ne.s32.totalorder %s72, %s73
      %p84 = scmp.eq.s32.totalorder %s26, 0
      %p85 = por %p83, %p84
      %p86 = scmp.ne.s32.totalorder %s72, %s73
      %p87 = scmp.eq.s32.totalorder %s27, 3
      %p88 = por %p86, %p87
      %p90 = scmp.ne.s32.totalorder %s73, %s89
      %p91 = scmp.eq.s32.totalorder %s27, 0
      %p92 = por %p90, %p91
      %s94 = sadd.s32 %s93, 1
      %p97 = scmp.eq.s32.totalorder %s21, 3
      %p98 = scmp.ne.s32.totalorder %s93, %s95
      %p99 = scmp.eq.s32.totalorder %s21, 0
      %p100 = por %p98, %p99
      %p101 = scmp.ne.s32.totalorder %s93, %s95
      %p102 = scmp.eq.s32.totalorder %s26, 3
      %p103 = por %p101, %p102
      %p104 = scmp.ne.s32.totalorder %s95, %s96
      %p105 = scmp.eq.s32.totalorder %s26, 0
      %p106 = por %p104, %p105
      %p107 = scmp.ne.s32.totalorder %s95, %s96
      %p108 = scmp.eq.s32.totalorder %s27, 3
      %p109 = por %p107, %p108
      %p111 = scmp.ne.s32.totalorder %s96, %s110
      %p112 = scmp.eq.s32.totalorder %s27, 0
      %p113 = por %p111, %p112
      %s115 = sadd.s32 %s114, 1
      %p118 = scmp.eq.s32.totalorder %s21, 3
      %p119 = scmp.ne.s32.totalorder %s114, %s116
      %p120 = scmp.eq.s32.totalorder %s21, 0
      %p121 = por %p119, %p120
      %p122 = scmp.ne.s32.totalorder %s114, %s116
      %p123 = scmp.eq.s32.totalorder %s26, 3
      %p124 = por %p122, %p123
      %p125 = scmp.ne.s32.totalorder %s116, %s117
      %p126 = scmp.eq.s32.totalorder %s26, 0
      %p127 = por %p125, %p126
      %p128 = scmp.ne.s32.totalorder %s116, %s117
      %p129 = scmp.eq.s32.totalorder %s27, 3
      %p130 = por %p128, %p129
      %p132 = scmp.ne.s32.totalorder %s117, %s131
      %p133 = scmp.eq.s32.totalorder %s27, 0
      %p134 = por %p132, %p133
      %s136 = sadd.s32 %s135, 1
      %p139 = scmp.eq.s32.totalorder %s21, 3
      %p140 = scmp.ne.s32.totalorder %s135, %s137
      %p141 = scmp.eq.s32.totalorder %s21, 0
      %p142 = por %p140, %p141
      %p143 = scmp.ne.s32.totalorder %s135, %s137
      %p144 = scmp.eq.s32.totalorder %s26, 3
      %p145 = por %p143, %p144
      %p146 = scmp.ne.s32.totalorder %s137, %s138
      %p147 = scmp.eq.s32.totalorder %s26, 0
      %p148 = por %p146, %p147
      %p149 = scmp.ne.s32.totalorder %s137, %s138
      %p150 = scmp.eq.s32.totalorder %s27, 3
      %p151 = por %p149, %p150
      %p153 = scmp.ne.s32.totalorder %s138, %s152
      %p154 = scmp.eq.s32.totalorder %s27, 0
      %p155 = por %p153, %p154
      %s157 = sadd.s32 %s156, 1
      %p160 = scmp.eq.s32.totalorder %s21, 3
      %p161 = scmp.ne.s32.totalorder %s156, %s158
      %p162 = scmp.eq.s32.totalorder %s21, 0
      %p163 = por %p161, %p162
      %p164 = scmp.ne.s32.totalorder %s156, %s158
      %p165 = scmp.eq.s32.totalorder %s26, 3
      %p166 = por %p164, %p165
      %p167 = scmp.ne.s32.totalorder %s158, %s159
      %p168 = scmp.eq.s32.totalorder %s26, 0
      %p169 = por %p167, %p168
      %p170 = scmp.ne.s32.totalorder %s158, %s159
      %p171 = scmp.eq.s32.totalorder %s27, 3
      %p172 = por %p170, %p171
      %p174 = scmp.ne.s32.totalorder %s159, %s173
      %p175 = scmp.eq.s32.totalorder %s27, 0
      %p176 = por %p174, %p175
      %s178 = sadd.s32 %s177, 1
      %p181 = scmp.eq.s32.totalorder %s21, 3
      %p182 = scmp.ne.s32.totalorder %s177, %s179
      %p183 = scmp.eq.s32.totalorder %s21, 0
      %p184 = por %p182, %p183
      %p185 = scmp.ne.s32.totalorder %s177, %s179
      %p186 = scmp.eq.s32.totalorder %s26, 3
      %p187 = por %p185, %p186
      %p188 = scmp.ne.s32.totalorder %s179, %s180
      %p189 = scmp.eq.s32.totalorder %s26, 0
      %p190 = por %p188, %p189
      %p191 = scmp.ne.s32.totalorder %s179, %s180
      %p192 = scmp.eq.s32.totalorder %s27, 3
      %p193 = por %p191, %p192
      %p195 = scmp.ne.s32.totalorder %s180, %s194
      %p196 = scmp.eq.s32.totalorder %s27, 0
      %p197 = por %p195, %p196
      %s199 = sadd.s32 %s198, 1
      %p202 = scmp.eq.s32.totalorder %s21, 3
      %p203 = scmp.ne.s32.totalorder %s198, %s200
      %p204 = scmp.eq.s32.totalorder %s21, 0
      %p205 = por %p203, %p204
      %p206 = scmp.ne.s32.totalorder %s198, %s200
      %p207 = scmp.eq.s32.totalorder %s26, 3
      %p208 = por %p206, %p207
      %p209 = scmp.ne.s32.totalorder %s200, %s201
      %p210 = scmp.eq.s32.totalorder %s26, 0
      %p211 = por %p209, %p210
      %p212 = scmp.ne.s32.totalorder %s200, %s201
      %p213 = scmp.eq.s32.totalorder %s27, 3
      %p214 = por %p212, %p213
      %p216 = scmp.ne.s32.totalorder %s201, %s215
      %p217 = scmp.eq.s32.totalorder %s27, 0
      %p218 = por %p216, %p217
      %s220 = sadd.s32 %s219, 1
      %p223 = scmp.eq.s32.totalorder %s21, 3
      %p224 = scmp.ne.s32.totalorder %s219, %s221
      %p225 = scmp.eq.s32.totalorder %s21, 0
      %p226 = por %p224, %p225
      %p227 = scmp.ne.s32.totalorder %s219, %s221
      %p228 = scmp.eq.s32.totalorder %s26, 3
      %p229 = por %p227, %p228
      %p230 = scmp.ne.s32.totalorder %s221, %s222
      %p231 = scmp.eq.s32.totalorder %s26, 0
      %p232 = por %p230, %p231
      %p233 = scmp.ne.s32.totalorder %s221, %s222
      %p234 = scmp.eq.s32.totalorder %s27, 3
      %p235 = por %p233, %p234
      %p237 = scmp.ne.s32.totalorder %s222, %s236
      %p238 = scmp.eq.s32.totalorder %s27, 0
      %p239 = por %p237, %p238
      %s241 = sadd.s32 %s240, 1
      %p244 = scmp.eq.s32.totalorder %s21, 3
      %p245 = scmp.ne.s32.totalorder %s240, %s242
      %p246 = scmp.eq.s32.totalorder %s21, 0
      %p247 = por %p245, %p246
      %p248 = scmp.ne.s32.totalorder %s240, %s242
      %p249 = scmp.eq.s32.totalorder %s26, 3
      %p250 = por %p248, %p249
      %p251 = scmp.ne.s32.totalorder %s242, %s243
      %p252 = scmp.eq.s32.totalorder %s26, 0
      %p253 = por %p251, %p252
      %p254 = scmp.ne.s32.totalorder %s242, %s243
      %p255 = scmp.eq.s32.totalorder %s27, 3
      %p256 = por %p254, %p255
      %p258 = scmp.ne.s32.totalorder %s243, %s257
      %p259 = scmp.eq.s32.totalorder %s27, 0
      %p260 = por %p258, %p259
      %s262 = sadd.s32 %s261, 1
      %p265 = scmp.eq.s32.totalorder %s21, 3
      %p266 = scmp.ne.s32.totalorder %s261, %s263
      %p267 = scmp.eq.s32.totalorder %s21, 0
      %p268 = por %p266, %p267
      %p269 = scmp.ne.s32.totalorder %s261, %s263
      %p270 = scmp.eq.s32.totalorder %s26, 3
      %p271 = por %p269, %p270
      %p272 = scmp.ne.s32.totalorder %s263, %s264
      %p273 = scmp.eq.s32.totalorder %s26, 0
      %p274 = por %p272, %p273
      %p275 = scmp.ne.s32.totalorder %s263, %s264
      %p276 = scmp.eq.s32.totalorder %s27, 3
      %p277 = por %p275, %p276
      %p279 = scmp.ne.s32.totalorder %s264, %s278
      %p280 = scmp.eq.s32.totalorder %s27, 0
      %p281 = por %p279, %p280
      %s283 = sadd.s32 %s282, 1
      %p286 = scmp.eq.s32.totalorder %s21, 3
      %p287 = scmp.ne.s32.totalorder %s282, %s284
      %p288 = scmp.eq.s32.totalorder %s21, 0
      %p289 = por %p287, %p288
      %p290 = scmp.ne.s32.totalorder %s282, %s284
      %p291 = scmp.eq.s32.totalorder %s26, 3
      %p292 = por %p290, %p291
      %p293 = scmp.ne.s32.totalorder %s284, %s285
      %p294 = scmp.eq.s32.totalorder %s26, 0
      %p295 = por %p293, %p294
      %p296 = scmp.ne.s32.totalorder %s284, %s285
      %p297 = scmp.eq.s32.totalorder %s27, 3
      %p298 = por %p296, %p297
      %p300 = scmp.ne.s32.totalorder %s285, %s299
      %p301 = scmp.eq.s32.totalorder %s27, 0
      %p302 = por %p300, %p301
      %s304 = sadd.s32 %s303, 1
      %p307 = scmp.eq.s32.totalorder %s21, 3
      %p308 = scmp.ne.s32.totalorder %s303, %s305
      %p309 = scmp.eq.s32.totalorder %s21, 0
      %p310 = por %p308, %p309
      %p311 = scmp.ne.s32.totalorder %s303, %s305
      %p312 = scmp.eq.s32.totalorder %s26, 3
      %p313 = por %p311, %p312
      %p314 = scmp.ne.s32.totalorder %s305, %s306
      %p315 = scmp.eq.s32.totalorder %s26, 0
      %p316 = por %p314, %p315
      %p317 = scmp.ne.s32.totalorder %s305, %s306
      %p318 = scmp.eq.s32.totalorder %s27, 3
      %p319 = por %p317, %p318
      %p321 = scmp.ne.s32.totalorder %s306, %s320
      %p322 = scmp.eq.s32.totalorder %s27, 0
      %p323 = por %p321, %p322
      %s325 = sadd.s32 %s324, 1
      %p328 = scmp.eq.s32.totalorder %s21, 3
      %p329 = scmp.ne.s32.totalorder %s324, %s326
      %p330 = scmp.eq.s32.totalorder %s21, 0
      %p331 = por %p329, %p330
      %p332 = scmp.ne.s32.totalorder %s324, %s326
      %p333 = scmp.eq.s32.totalorder %s26, 3
      %p334 = por %p332, %p333
      %p335 = scmp.ne.s32.totalorder %s326, %s327
      %p336 = scmp.eq.s32.totalorder %s26, 0
      %p337 = por %p335, %p336
      %p338 = scmp.ne.s32.totalorder %s326, %s327
      %p339 = scmp.eq.s32.totalorder %s27, 3
      %p340 = por %p338, %p339
      %p342 = scmp.ne.s32.totalorder %s327, %s341
      %p343 = scmp.eq.s32.totalorder %s27, 0
      %p344 = por %p342, %p343
      %s345 = ssub.s32 %s29, %s36
      %s346 = ssub.s32 %s28, %s40
      %s347 = sor.u32 %s345, %s346
      %p348 = scmp.eq.s32.totalorder %s347, 0
      %s350 = sadd.s32 %s349, 1
      %s351 = scalar_select %p348, %s349, %s350
      %p354 = pneg %p348
      %p355 = scmp.eq.s32.totalorder %s21, 3
      %p356 = por %p354, %p355
      %p357 = scmp.ne.s32.totalorder %s349, %s352
      %p358 = scmp.eq.s32.totalorder %s21, 0
      %p359 = por %p357, %p358
      %p360 = scmp.ne.s32.totalorder %s349, %s352
      %p361 = scmp.eq.s32.totalorder %s26, 3
      %p362 = por %p360, %p361
      %p363 = scmp.ne.s32.totalorder %s352, %s353
      %p364 = scmp.eq.s32.totalorder %s26, 0
      %p365 = por %p363, %p364
      %p366 = scmp.ne.s32.totalorder %s352, %s353
      %p367 = scmp.eq.s32.totalorder %s27, 3
      %p368 = por %p366, %p367
      %p370 = scmp.ne.s32.totalorder %s353, %s369
      %p371 = scmp.eq.s32.totalorder %s27, 0
      %p372 = por %p370, %p371
      %p373 = scmp.le.s32.totalorder 1, %s21
      %p374 = scmp.lt.s32.totalorder %s21, 5
      %p375 = pnand %p373, %p374
      %p376 = pneg %p375
      // Predicated region
      $region9: #{ext_bert_encoder_forward.1} parent=5 // pred_check
        _
      $region10: #{ext_bert_encoder_forward.1} parent=5 // pred_check_branch
        %378 = sbr.rel (%p375) target = $region12
      $region11: #{ext_bert_encoder_forward.1} parent=5 // pred_region
        %s379 = ssub.s32 %s21, 1
        // Predicated region
        $region13: #{ext_bert_encoder_forward.1} parent=11 // pred_check
          %p380 = pneg %p106
        $region14: #{ext_bert_encoder_forward.1} parent=11 // pred_check_branch
          %382 = sbr.rel (%p380) target = $region16
        $region15: #{ext_bert_encoder_forward.1} parent=11 // pred_region
          _
        $region16: #{ext_bert_encoder_forward.1} parent=11 // pred_fallthru
          _
        // Predicated region
        $region17: #{ext_bert_encoder_forward.1} parent=11 // pred_check
          %p383 = pneg %p127
        $region18: #{ext_bert_encoder_forward.1} parent=11 // pred_check_branch
          %385 = sbr.rel (%p383) target = $region20
        $region19: #{ext_bert_encoder_forward.1} parent=11 // pred_region
          _
        $region20: #{ext_bert_encoder_forward.1} parent=11 // pred_fallthru
          _
        // Predicated region
        $region21: #{ext_bert_encoder_forward.1} parent=11 // pred_check
          %p386 = pneg %p148
        $region22: #{ext_bert_encoder_forward.1} parent=11 // pred_check_branch
          %388 = sbr.rel (%p386) target = $region24
        $region23: #{ext_bert_encoder_forward.1} parent=11 // pred_region
          _
        $region24: #{ext_bert_encoder_forward.1} parent=11 // pred_fallthru
          _
        // Predicated region
        $region25: #{ext_bert_encoder_forward.1} parent=11 // pred_check
          %p389 = pneg %p169
        $region26: #{ext_bert_encoder_forward.1} parent=11 // pred_check_branch
          %391 = sbr.rel (%p389) target = $region28
        $region27: #{ext_bert_encoder_forward.1} parent=11 // pred_region
          _
        $region28: #{ext_bert_encoder_forward.1} parent=11 // pred_fallthru
          _
        // Predicated region
        $region29: #{ext_bert_encoder_forward.1} parent=11 // pred_check
          %p392 = pneg %p190
        $region30: #{ext_bert_encoder_forward.1} parent=11 // pred_check_branch
          %394 = sbr.rel (%p392) target = $region32
        $region31: #{ext_bert_encoder_forward.1} parent=11 // pred_region
          %s396 = ssub.s32 512, 512
          %397 = vsyncadd [#allocation4], %s396
          %s398 = sshll.u32 [#allocation3], 4
          %s399 = int_to_ptr.vmem [resolvable:$true] %s398
          %404 = dma.hbm_to_vmem [thread:$0]  %s6, 512, %s399, [#allocation4], 64, 64, 4
        $region32: #{ext_bert_encoder_forward.1} parent=11 // pred_fallthru
          _
        // Predicated region
        $region33: #{ext_bert_encoder_forward.1} parent=11 // pred_check
          %p405 = pneg %p211
        $region34: #{ext_bert_encoder_forward.1} parent=11 // pred_check_branch
          %407 = sbr.rel (%p405) target = $region36
        $region35: #{ext_bert_encoder_forward.1} parent=11 // pred_region
          _
        $region36: #{ext_bert_encoder_forward.1} parent=11 // pred_fallthru
          _
        // Predicated region
        $region37: #{ext_bert_encoder_forward.1} parent=11 // pred_check
          %p408 = pneg %p232
        $region38: #{ext_bert_encoder_forward.1} parent=11 // pred_check_branch
          %410 = sbr.rel (%p408) target = $region40
        $region39: #{ext_bert_encoder_forward.1} parent=11 // pred_region
          _
        $region40: #{ext_bert_encoder_forward.1} parent=11 // pred_fallthru
          _
        // Predicated region
        $region41: #{ext_bert_encoder_forward.1} parent=11 // pred_check
          %p411 = pneg %p253
        $region42: #{ext_bert_encoder_forward.1} parent=11 // pred_check_branch
          %413 = sbr.rel (%p411) target = $region44
        $region43: #{ext_bert_encoder_forward.1} parent=11 // pred_region
          _
        $region44: #{ext_bert_encoder_forward.1} parent=11 // pred_fallthru
          _
        // Predicated region
        $region45: #{ext_bert_encoder_forward.1} parent=11 // pred_check
          %p414 = pneg %p274
        $region46: #{ext_bert_encoder_forward.1} parent=11 // pred_check_branch
          %416 = sbr.rel (%p414) target = $region48
        $region47: #{ext_bert_encoder_forward.1} parent=11 // pred_region
          _
        $region48: #{ext_bert_encoder_forward.1} parent=11 // pred_fallthru
          _
        // Predicated region
        $region49: #{ext_bert_encoder_forward.1} parent=11 // pred_check
          %p417 = pneg %p295
        $region50: #{ext_bert_encoder_forward.1} parent=11 // pred_check_branch
          %419 = sbr.rel (%p417) target = $region52
        $region51: #{ext_bert_encoder_forward.1} parent=11 // pred_region
          _
        $region52: #{ext_bert_encoder_forward.1} parent=11 // pred_fallthru
          _
        // Predicated region
        $region53: #{ext_bert_encoder_forward.1} parent=11 // pred_check
          %p420 = pneg %p316
        $region54: #{ext_bert_encoder_forward.1} parent=11 // pred_check_branch
          %422 = sbr.rel (%p420) target = $region56
        $region55: #{ext_bert_encoder_forward.1} parent=11 // pred_region
          _
        $region56: #{ext_bert_encoder_forward.1} parent=11 // pred_fallthru
          _
        // Predicated region
        $region57: #{ext_bert_encoder_forward.1} parent=11 // pred_check
          %p423 = pneg %p337
        $region58: #{ext_bert_encoder_forward.1} parent=11 // pred_check_branch
          %425 = sbr.rel (%p423) target = $region60
        $region59: #{ext_bert_encoder_forward.1} parent=11 // pred_region
          _
        $region60: #{ext_bert_encoder_forward.1} parent=11 // pred_fallthru
          _
      $region12: #{ext_bert_encoder_forward.1} parent=5 // pred_fallthru
        _
      %p426 = scmp.lt.s32.totalorder %s21, 4
      // Predicated region
      $region61: #{ext_bert_encoder_forward.1} parent=5 // pred_check
        %p427 = pneg %p426
      $region62: #{ext_bert_encoder_forward.1} parent=5 // pred_check_branch
        %429 = sbr.rel (%p427) target = $region64
      $region63: #{ext_bert_encoder_forward.1} parent=5 // pred_region
        // Predicated region
        $region65: #{ext_bert_encoder_forward.1} parent=63 // pred_check
          %p430 = pneg %p53
        $region66: #{ext_bert_encoder_forward.1} parent=63 // pred_check_branch
          %432 = sbr.rel (%p430) target = $region68
        $region67: #{ext_bert_encoder_forward.1} parent=63 // pred_region
          %p433 = scmp.lt.s32.totalorder %s28, 1
          %s434 = scalar_select %p433, %s28, 1
          %s435 = smul.addr %s434, 8
          %s436 = scalar_lea.vmem %s0, %s435
        $region68: #{ext_bert_encoder_forward.1} parent=63 // pred_fallthru
          _
        // Predicated region
        $region69: #{ext_bert_encoder_forward.1} parent=63 // pred_check
          %p437 = pneg %p79
        $region70: #{ext_bert_encoder_forward.1} parent=63 // pred_check_branch
          %439 = sbr.rel (%p437) target = $region72
        $region71: #{ext_bert_encoder_forward.1} parent=63 // pred_region
          %p440 = scmp.lt.s32.totalorder %s28, 1
          %s441 = scalar_select %p440, %s28, 1
          %s442 = scalar_lea.vmem %s1, %s441
        $region72: #{ext_bert_encoder_forward.1} parent=63 // pred_fallthru
          _
      $region64: #{ext_bert_encoder_forward.1} parent=5 // pred_fallthru
        _
      %p443 = scmp.le.s32.totalorder 1, %s21
      %p444 = scmp.lt.s32.totalorder %s21, 5
      %p445 = pnand %p443, %p444
      %p446 = pneg %p445
      // Predicated region
      $region73: #{ext_bert_encoder_forward.1} parent=5 // pred_check
        _
      $region74: #{ext_bert_encoder_forward.1} parent=5 // pred_check_branch
        %448 = sbr.rel (%p445) target = $region76
      $region75: #{ext_bert_encoder_forward.1} parent=5 // pred_region
        %s449 = ssub.s32 %s21, 1
        // Predicated region
        $region77: #{ext_bert_encoder_forward.1} parent=75 // pred_check
          %p450 = pneg %p190
        $region78: #{ext_bert_encoder_forward.1} parent=75 // pred_check_branch
          %452 = sbr.rel (%p450) target = $region80
        $region79: #{ext_bert_encoder_forward.1} parent=75 // pred_region
          %453 = dma.done [#allocation4], 512
        $region80: #{ext_bert_encoder_forward.1} parent=75 // pred_fallthru
          _
        %p454 = scmp.lt.s32.totalorder %s30, 1
        %s455 = scalar_select %p454, %s30, 1
        %s456 = smul.addr %s455, 8
        %s457 = scalar_lea.vmem %s0, %s456
        %p458 = pneg %p59
        %p459 = pneg %p56
        %p460 = scmp.lt.s32.totalorder %s30, 1
        %s461 = scalar_select %p460, %s30, 1
        %s462 = scalar_lea.vmem %s1, %s461
        %p463 = pneg %p85
        %p464 = pneg %p82
        %p465 = pneg %p106
        %p466 = pneg %p103
        %p467 = pneg %p127
        %p468 = pneg %p124
        %p469 = pneg %p148
        %p470 = pneg %p145
        %p471 = pneg %p169
        %p472 = pneg %p166
        %p473 = pneg %p190
        %p474 = pneg %p187
        %p475 = pneg %p211
        %p476 = pneg %p208
        %p477 = pneg %p232
        %p478 = pneg %p229
        %p479 = pneg %p253
        %p480 = pneg %p250
        %p481 = pneg %p274
        %p482 = pneg %p271
        %p483 = pneg %p295
        %p484 = pneg %p292
        %p485 = pneg %p316
        %p486 = pneg %p313
        %p487 = pneg %p337
        %p488 = pneg %p334
        %p489 = pneg %p365
        %p490 = pneg %p362
        %p491 = scmp.lt.s32.totalorder %s31, 1
        %s492 = scalar_select %p491, %s31, 1
        %p493 = scmp.lt.s32.totalorder %s30, 1
        %s494 = scalar_select %p493, %s30, 1
        %s495 = smul.addr %s492, 2
        %s496 = sadd.s32 %s494, %s495
        %s497 = smul.addr %s496, 8
        %s498 = scalar_lea.vmem %s14, %s497
        %p499 = scmp.lt.s32.totalorder %s30, 1
        %s500 = scalar_select %p499, %s30, 1
        %s501 = smul.addr %s500, 8
        %s502 = scalar_lea.vmem %s0, %s501
        %p503 = scmp.lt.s32.totalorder %s30, 1
        %s504 = scalar_select %p503, %s30, 1
        %s505 = scalar_lea.vmem %s1, %s504
        %p506 = scmp.lt.s32.totalorder %s31, 1
        %s507 = scalar_select %p506, %s31, 1
        %p508 = scmp.lt.s32.totalorder %s30, 1
        %s509 = scalar_select %p508, %s30, 1
        %s510 = smul.addr %s507, 2
        %s511 = sadd.s32 %s509, %s510
        %s512 = smul.addr %s511, 8
        %s513 = scalar_lea.vmem %s14, %s512
        %p515 = scmp.eq.s32.totalorder %s31, 0
        // Predicated region
        $region81: #{ext_bert_encoder_forward.1} parent=75 // pred_check
          %p516 = pneg %p515
        $region82: #{ext_bert_encoder_forward.1} parent=75 // pred_check_branch
          %518 = sbr.rel (%p516) target = $region84
        $region83: #{ext_bert_encoder_forward.1} parent=75 // pred_region
          %v519 = vld [vmem:[%s502] sm:$0xff]
          %vm520 = vcmask 261120
          %521 = vst.msk [vmem:[#allocation2] sm:$0xff] %vm520, %v519
        $region84: #{ext_bert_encoder_forward.1} parent=75 // pred_fallthru
          _
        %v522 = vld [vmem:[#allocation2] sm:$0xff]
        %v523 = vld [vmem:[%s505] sm:$0x1]
        %v524 = vpack.c.bf16 %v522, %v522
        %s525 = smul.u32 %s31, 4
        %s526 = smul.addr %s525, 4
        %s527 = scalar_lea.vmem %s2, %s526
        %v528 = vld [vmem:[%s527] sm:$0xf]
        %v529 = vld [vmem:[%s527 + $0x4] sm:$0xf]
        %v530 = vld [vmem:[%s527 + $0x8] sm:$0xf]
        %v531 = vld [vmem:[%s527 + $0xc] sm:$0xf]
        %s532 = scalar_lea.vmem %s3, %s31
        %v533 = vld [vmem:[%s532] sm:$0x1]
        %v535 = vlaneseq
        %v536 = vshrl.u32 %v535, 7
        %v537 = vsub.s32 0, %v536
        %v538 = vrot.slane %v533, %v537
        %v544 = vunpack.c.l.b16 %v528
        %v545 = vunpack.c.l.b16 %v529
        %v546 = vunpack.c.l.b16 %v530
        %v547 = vunpack.c.l.b16 %v531
        %v548 = vpack.c.b16 %v545, %v544
        %v549 = vpack.c.b16 %v547, %v546
        %vm552 = vcmask 261120
        %v554 = vsel %vm552, %v524, 0
        %556 = vmatprep.subr.bf16.mxu0 0
        %557 = vmatpush1.bf16.msra.mxu0 %v548
        %558 = vmatprep.subr.bf16.mxu0 0
        %559 = vmatpush1.bf16.msra.mxu0 %v549
        %560 = vmatprep.subr.bf16.mxu0 0
        %561 = vmatpush1.bf16.msra.mxu0 0
        %562 = vmatprep.subr.bf16.mxu0 0
        %563 = vmatpush1.bf16.msra.mxu0 0
        %564 = vmatprep.subr.bf16.mxu0 0
        %565 = vmatpush1.bf16.msra.mxu0 0
        %566 = vmatprep.subr.bf16.mxu0 0
        %567 = vmatpush1.bf16.msra.mxu0 0
        %568 = vmatprep.subr.bf16.mxu0 0
        %569 = vmatpush1.bf16.msra.mxu0 0
        %570 = vmatprep.subr.bf16.mxu0 0
        %571 = vmatpush1.bf16.msra.mxu0 0
        %572 = vmatprep.subr.bf16.mxu0 0
        %573 = vmatpush1.bf16.msra.mxu0 0
        %574 = vmatprep.subr.bf16.mxu0 0
        %575 = vmatpush1.bf16.msra.mxu0 0
        %576 = vmatprep.subr.bf16.mxu0 0
        %577 = vmatpush1.bf16.msra.mxu0 0
        %578 = vmatprep.subr.bf16.mxu0 0
        %579 = vmatpush1.bf16.msra.mxu0 0
        %580 = vmatprep.subr.bf16.mxu0 0
        %581 = vmatpush1.bf16.msra.mxu0 0
        %582 = vmatprep.subr.bf16.mxu0 0
        %583 = vmatpush1.bf16.msra.mxu0 0
        %584 = vmatprep.subr.bf16.mxu0 0
        %585 = vmatpush1.bf16.msra.mxu0 0
        %586 = vmatprep.subr.bf16.mxu0 0
        %587 = vmatpush1.bf16.msra.mxu0 0
        %588 = vmatprep.mubr.bf16.mxu0 0
        %589 = vmatmul.mubr.bf16.gmra.mrb[0].mxu0 %v554
        %v590 = vpop.f32.mrb[0].mxu0
        %v591 = vadd.f32 %v538, %v590
        %v592 = vpop.f32.mrb[0].mxu0
        %v593 = vpop.f32.mrb[0].mxu0
        %v594 = vpop.f32.mrb[0].mxu0
        %595 = vdwg.mxu0
        %s596 = smul.addr %s525, 4
        %s597 = scalar_lea.vmem %s4, %s596
        %v598 = vld [vmem:[%s597] sm:$0xf]
        %v599 = vld [vmem:[%s597 + $0x4] sm:$0xf]
        %v600 = vld [vmem:[%s597 + $0x8] sm:$0xf]
        %v601 = vld [vmem:[%s597 + $0xc] sm:$0xf]
        %v602 = vpack.c.bf16 %v591, %v591
        %v604 = vlaneseq
        %v605 = vshrl.u32 %v604, 7
        %v606 = vsub.s32 0, %v605
        %v607 = vrot.slane %v523, %v606
        %610 = vrot.lane.b32.xlu0 %v602, 96
        %v611 = vpop.permute.xlu0 %610
        %vm612 = vcmask 64512
        %v614 = vsel %vm612, %v602, 0
        %v617 = vsel %vm612, %v611, 0
        %619 = vmatprep.subr.bf16.mxu0 0
        %620 = vmatpush1.bf16.xpose.msra.mxu0 %v617
        %621 = vmatprep.subr.bf16.mxu0 0
        %622 = vmatpush1.bf16.xpose.msra.mxu0 0
        %623 = vmatprep.subr.bf16.mxu0 0
        %624 = vmatpush1.bf16.xpose.msra.mxu0 0
        %625 = vmatprep.subr.bf16.mxu0 0
        %626 = vmatpush1.bf16.xpose.msra.mxu0 0
        %627 = vmatprep.subr.bf16.mxu0 0
        %628 = vmatpush1.bf16.xpose.msra.mxu0 0
        %629 = vmatprep.subr.bf16.mxu0 0
        %630 = vmatpush1.bf16.xpose.msra.mxu0 0
        %631 = vmatprep.subr.bf16.mxu0 0
        %632 = vmatpush1.bf16.xpose.msra.mxu0 0
        %633 = vmatprep.subr.bf16.mxu0 0
        %634 = vmatpush1.bf16.xpose.msra.mxu0 0
        %635 = vmatprep.subr.bf16.mxu0 0
        %636 = vmatpush1.bf16.xpose.msra.mxu0 0
        %637 = vmatprep.subr.bf16.mxu0 0
        %638 = vmatpush1.bf16.xpose.msra.mxu0 0
        %639 = vmatprep.subr.bf16.mxu0 0
        %640 = vmatpush1.bf16.xpose.msra.mxu0 0
        %641 = vmatprep.subr.bf16.mxu0 0
        %642 = vmatpush1.bf16.xpose.msra.mxu0 0
        %643 = vmatprep.subr.bf16.mxu0 0
        %644 = vmatpush1.bf16.xpose.msra.mxu0 0
        %645 = vmatprep.subr.bf16.mxu0 0
        %646 = vmatpush1.bf16.xpose.msra.mxu0 0
        %647 = vmatprep.subr.bf16.mxu0 0
        %648 = vmatpush1.bf16.xpose.msra.mxu0 0
        %649 = vmatprep.subr.bf16.mxu0 0
        %650 = vmatpush1.bf16.xpose.msra.mxu0 0
        %651 = vmatprep.mubr.bf16.mxu0 0
        %652 = vmatmul.mubr.bf16.gmra.mrb[0].mxu0 %v614
        %v653 = vpop.f32.mrb[0].mxu0
        %v654 = vadd.f32 %v607, %v653
        %v655 = vpop.f32.mrb[0].mxu0
        %v656 = vpop.f32.mrb[0].mxu0
        %v657 = vpop.f32.mrb[0].mxu0
        %658 = vdwg.mxu0
        %v659 = vsel %vm612, %v654, -inf
        %660 = vmax.xlane.f32.xlu0 %v659
        %v661 = vpop.xlane.xlu0 %660
        %v662 = vsub.f32 %v654, %v661
        %v663 = vmul.f32 %v662, 1.442695
        %v664 = vpow.pop %v663
        %v665 = vsel %vm612, %v664, 0.0
        %666 = vadd.xlane.f32.xlu0 %v665
        %v667 = vpop.xlane.xlu0 %666
        %v668 = vrcp.pop %v667
        %v669 = vmul.f32 %v664, %v668
        %v670 = vpack.c.bf16 %v669, %v669
        %671 = vrot.lane.b32.xlu0 %v602, 64
        %v672 = vpop.permute.xlu0 %671
        %v674 = vsel %vm612, %v670, 0
        %vm676 = vcmask 1043456
        %v678 = vsel %vm676, %v672, 0
        %680 = vmatprep.subr.bf16.mxu0 0
        %681 = vmatpush1.bf16.msra.mxu0 %v678
        %682 = vmatprep.subr.bf16.mxu0 0
        %683 = vmatpush1.bf16.msra.mxu0 0
        %684 = vmatprep.subr.bf16.mxu0 0
        %685 = vmatpush1.bf16.msra.mxu0 0
        %686 = vmatprep.subr.bf16.mxu0 0
        %687 = vmatpush1.bf16.msra.mxu0 0
        %688 = vmatprep.subr.bf16.mxu0 0
        %689 = vmatpush1.bf16.msra.mxu0 0
        %690 = vmatprep.subr.bf16.mxu0 0
        %691 = vmatpush1.bf16.msra.mxu0 0
        %692 = vmatprep.subr.bf16.mxu0 0
        %693 = vmatpush1.bf16.msra.mxu0 0
        %694 = vmatprep.subr.bf16.mxu0 0
        %695 = vmatpush1.bf16.msra.mxu0 0
        %696 = vmatprep.subr.bf16.mxu0 0
        %697 = vmatpush1.bf16.msra.mxu0 0
        %698 = vmatprep.subr.bf16.mxu0 0
        %699 = vmatpush1.bf16.msra.mxu0 0
        %700 = vmatprep.subr.bf16.mxu0 0
        %701 = vmatpush1.bf16.msra.mxu0 0
        %702 = vmatprep.subr.bf16.mxu0 0
        %703 = vmatpush1.bf16.msra.mxu0 0
        %704 = vmatprep.subr.bf16.mxu0 0
        %705 = vmatpush1.bf16.msra.mxu0 0
        %706 = vmatprep.subr.bf16.mxu0 0
        %707 = vmatpush1.bf16.msra.mxu0 0
        %708 = vmatprep.subr.bf16.mxu0 0
        %709 = vmatpush1.bf16.msra.mxu0 0
        %710 = vmatprep.subr.bf16.mxu0 0
        %711 = vmatpush1.bf16.msra.mxu0 0
        %712 = vmatprep.mubr.bf16.mxu0 0
        %713 = vmatmul.mubr.bf16.gmra.mrb[0].mxu0 %v674
        %v714 = vpop.f32.mrb[0].mxu0
        %v715 = vadd.f32 0.0, %v714
        %v716 = vpop.f32.mrb[0].mxu0
        %v717 = vpop.f32.mrb[0].mxu0
        %v718 = vpop.f32.mrb[0].mxu0
        %719 = vdwg.mxu0
        %v720 = vpack.c.bf16 %v715, %v715
        %721 = vrot.lane.b32.xlu0 %v602, 120
        %v722 = vpop.permute.xlu0 %721
        %723 = vrot.lane.b32.xlu0 %v602, 88
        %v724 = vpop.permute.xlu0 %723
        %v726 = vsel %vm612, %v722, 0
        %v729 = vsel %vm612, %v724, 0
        %731 = vmatprep.subr.bf16.mxu0 0
        %732 = vmatpush1.bf16.xpose.msra.mxu0 %v729
        %733 = vmatprep.subr.bf16.mxu0 0
        %734 = vmatpush1.bf16.xpose.msra.mxu0 0
        %735 = vmatprep.subr.bf16.mxu0 0
        %736 = vmatpush1.bf16.xpose.msra.mxu0 0
        %737 = vmatprep.subr.bf16.mxu0 0
        %738 = vmatpush1.bf16.xpose.msra.mxu0 0
        %739 = vmatprep.subr.bf16.mxu0 0
        %740 = vmatpush1.bf16.xpose.msra.mxu0 0
        %741 = vmatprep.subr.bf16.mxu0 0
        %742 = vmatpush1.bf16.xpose.msra.mxu0 0
        %743 = vmatprep.subr.bf16.mxu0 0
        %744 = vmatpush1.bf16.xpose.msra.mxu0 0
        %745 = vmatprep.subr.bf16.mxu0 0
        %746 = vmatpush1.bf16.xpose.msra.mxu0 0
        %747 = vmatprep.subr.bf16.mxu0 0
        %748 = vmatpush1.bf16.xpose.msra.mxu0 0
        %749 = vmatprep.subr.bf16.mxu0 0
        %750 = vmatpush1.bf16.xpose.msra.mxu0 0
        %751 = vmatprep.subr.bf16.mxu0 0
        %752 = vmatpush1.bf16.xpose.msra.mxu0 0
        %753 = vmatprep.subr.bf16.mxu0 0
        %754 = vmatpush1.bf16.xpose.msra.mxu0 0
        %755 = vmatprep.subr.bf16.mxu0 0
        %756 = vmatpush1.bf16.xpose.msra.mxu0 0
        %757 = vmatprep.subr.bf16.mxu0 0
        %758 = vmatpush1.bf16.xpose.msra.mxu0 0
        %759 = vmatprep.subr.bf16.mxu0 0
        %760 = vmatpush1.bf16.xpose.msra.mxu0 0
        %761 = vmatprep.subr.bf16.mxu0 0
        %762 = vmatpush1.bf16.xpose.msra.mxu0 0
        %763 = vmatprep.mubr.bf16.mxu0 0
        %764 = vmatmul.mubr.bf16.gmra.mrb[0].mxu0 %v726
        %v765 = vpop.f32.mrb[0].mxu0
        %v766 = vadd.f32 %v607, %v765
        %v767 = vpop.f32.mrb[0].mxu0
        %v768 = vpop.f32.mrb[0].mxu0
        %v769 = vpop.f32.mrb[0].mxu0
        %770 = vdwg.mxu0
        %v771 = vsel %vm612, %v766, -inf
        %772 = vmax.xlane.f32.xlu0 %v771
        %v773 = vpop.xlane.xlu0 %772
        %v774 = vsub.f32 %v766, %v773
        %v775 = vmul.f32 %v774, 1.442695
        %v776 = vpow.pop %v775
        %v777 = vsel %vm612, %v776, 0.0
        %778 = vadd.xlane.f32.xlu0 %v777
        %v779 = vpop.xlane.xlu0 %778
        %v780 = vrcp.pop %v779
        %v781 = vmul.f32 %v776, %v780
        %v782 = vpack.c.bf16 %v781, %v781
        %783 = vrot.lane.b32.xlu0 %v602, 56
        %v784 = vpop.permute.xlu0 %783
        %v786 = vsel %vm612, %v782, 0
        %v789 = vsel %vm676, %v784, 0
        %791 = vmatprep.subr.bf16.mxu0 0
        %792 = vmatpush1.bf16.msra.mxu0 %v789
        %793 = vmatprep.subr.bf16.mxu0 0
        %794 = vmatpush1.bf16.msra.mxu0 0
        %795 = vmatprep.subr.bf16.mxu0 0
        %796 = vmatpush1.bf16.msra.mxu0 0
        %797 = vmatprep.subr.bf16.mxu0 0
        %798 = vmatpush1.bf16.msra.mxu0 0
        %799 = vmatprep.subr.bf16.mxu0 0
        %800 = vmatpush1.bf16.msra.mxu0 0
        %801 = vmatprep.subr.bf16.mxu0 0
        %802 = vmatpush1.bf16.msra.mxu0 0
        %803 = vmatprep.subr.bf16.mxu0 0
        %804 = vmatpush1.bf16.msra.mxu0 0
        %805 = vmatprep.subr.bf16.mxu0 0
        %806 = vmatpush1.bf16.msra.mxu0 0
        %807 = vmatprep.subr.bf16.mxu0 0
        %808 = vmatpush1.bf16.msra.mxu0 0
        %809 = vmatprep.subr.bf16.mxu0 0
        %810 = vmatpush1.bf16.msra.mxu0 0
        %811 = vmatprep.subr.bf16.mxu0 0
        %812 = vmatpush1.bf16.msra.mxu0 0
        %813 = vmatprep.subr.bf16.mxu0 0
        %814 = vmatpush1.bf16.msra.mxu0 0
        %815 = vmatprep.subr.bf16.mxu0 0
        %816 = vmatpush1.bf16.msra.mxu0 0
        %817 = vmatprep.subr.bf16.mxu0 0
        %818 = vmatpush1.bf16.msra.mxu0 0
        %819 = vmatprep.subr.bf16.mxu0 0
        %820 = vmatpush1.bf16.msra.mxu0 0
        %821 = vmatprep.subr.bf16.mxu0 0
        %822 = vmatpush1.bf16.msra.mxu0 0
        %823 = vmatprep.mubr.bf16.mxu0 0
        %824 = vmatmul.mubr.bf16.gmra.mrb[0].mxu0 %v786
        %v825 = vpop.f32.mrb[0].mxu0
        %v826 = vadd.f32 0.0, %v825
        %v827 = vpop.f32.mrb[0].mxu0
        %v828 = vpop.f32.mrb[0].mxu0
        %v829 = vpop.f32.mrb[0].mxu0
        %830 = vdwg.mxu0
        %v831 = vpack.c.bf16 %v826, %v826
        %v833 = vsel %vm612, %v831, 0
        %v836 = vsel %vm676, %v599, 0
        %838 = vmatprep.subr.bf16.mxu0 0
        %839 = vmatpush1.bf16.msra.mxu0 %v836
        %840 = vmatprep.subr.bf16.mxu0 0
        %841 = vmatpush1.bf16.msra.mxu0 0
        %842 = vmatprep.subr.bf16.mxu0 0
        %843 = vmatpush1.bf16.msra.mxu0 0
        %844 = vmatprep.subr.bf16.mxu0 0
        %845 = vmatpush1.bf16.msra.mxu0 0
        %846 = vmatprep.subr.bf16.mxu0 0
        %847 = vmatpush1.bf16.msra.mxu0 0
        %848 = vmatprep.subr.bf16.mxu0 0
        %849 = vmatpush1.bf16.msra.mxu0 0
        %850 = vmatprep.subr.bf16.mxu0 0
        %851 = vmatpush1.bf16.msra.mxu0 0
        %852 = vmatprep.subr.bf16.mxu0 0
        %853 = vmatpush1.bf16.msra.mxu0 0
        %854 = vmatprep.subr.bf16.mxu0 0
        %855 = vmatpush1.bf16.msra.mxu0 0
        %856 = vmatprep.subr.bf16.mxu0 0
        %857 = vmatpush1.bf16.msra.mxu0 0
        %858 = vmatprep.subr.bf16.mxu0 0
        %859 = vmatpush1.bf16.msra.mxu0 0
        %860 = vmatprep.subr.bf16.mxu0 0
        %861 = vmatpush1.bf16.msra.mxu0 0
        %862 = vmatprep.subr.bf16.mxu0 0
        %863 = vmatpush1.bf16.msra.mxu0 0
        %864 = vmatprep.subr.bf16.mxu0 0
        %865 = vmatpush1.bf16.msra.mxu0 0
        %866 = vmatprep.subr.bf16.mxu0 0
        %867 = vmatpush1.bf16.msra.mxu0 0
        %868 = vmatprep.subr.bf16.mxu0 0
        %869 = vmatpush1.bf16.msra.mxu0 0
        %870 = vmatprep.mubr.bf16.mxu0 0
        %871 = vmatmul.mubr.bf16.gmra.mrb[0].mxu0 %v833
        %v872 = vpop.f32.mrb[0].mxu0
        %v873 = vadd.f32 0.0, %v872
        %v874 = vpop.f32.mrb[0].mxu0
        %v875 = vpop.f32.mrb[0].mxu0
        %v876 = vpop.f32.mrb[0].mxu0
        %877 = vdwg.mxu0
        %v879 = vsel %vm612, %v720, 0
        %v882 = vsel %vm676, %v598, 0
        %884 = vmatprep.subr.bf16.mxu0 0
        %885 = vmatpush1.bf16.msra.mxu0 %v882
        %886 = vmatprep.subr.bf16.mxu0 0
        %887 = vmatpush1.bf16.msra.mxu0 0
        %888 = vmatprep.subr.bf16.mxu0 0
        %889 = vmatpush1.bf16.msra.mxu0 0
        %890 = vmatprep.subr.bf16.mxu0 0
        %891 = vmatpush1.bf16.msra.mxu0 0
        %892 = vmatprep.subr.bf16.mxu0 0
        %893 = vmatpush1.bf16.msra.mxu0 0
        %894 = vmatprep.subr.bf16.mxu0 0
        %895 = vmatpush1.bf16.msra.mxu0 0
        %896 = vmatprep.subr.bf16.mxu0 0
        %897 = vmatpush1.bf16.msra.mxu0 0
        %898 = vmatprep.subr.bf16.mxu0 0
        %899 = vmatpush1.bf16.msra.mxu0 0
        %900 = vmatprep.subr.bf16.mxu0 0
        %901 = vmatpush1.bf16.msra.mxu0 0
        %902 = vmatprep.subr.bf16.mxu0 0
        %903 = vmatpush1.bf16.msra.mxu0 0
        %904 = vmatprep.subr.bf16.mxu0 0
        %905 = vmatpush1.bf16.msra.mxu0 0
        %906 = vmatprep.subr.bf16.mxu0 0
        %907 = vmatpush1.bf16.msra.mxu0 0
        %908 = vmatprep.subr.bf16.mxu0 0
        %909 = vmatpush1.bf16.msra.mxu0 0
        %910 = vmatprep.subr.bf16.mxu0 0
        %911 = vmatpush1.bf16.msra.mxu0 0
        %912 = vmatprep.subr.bf16.mxu0 0
        %913 = vmatpush1.bf16.msra.mxu0 0
        %914 = vmatprep.subr.bf16.mxu0 0
        %915 = vmatpush1.bf16.msra.mxu0 0
        %916 = vmatprep.mubr.bf16.mxu0 0
        %917 = vmatmul.mubr.bf16.gmra.mrb[0].mxu0 %v879
        %v918 = vpop.f32.mrb[0].mxu0
        %v919 = vadd.f32 %v873, %v918
        %v920 = vpop.f32.mrb[0].mxu0
        %v921 = vpop.f32.mrb[0].mxu0
        %v922 = vpop.f32.mrb[0].mxu0
        %923 = vdwg.mxu0
        %924 = vrot.lane.b32.xlu0 %v602, 112
        %v925 = vpop.permute.xlu0 %924
        %926 = vrot.lane.b32.xlu0 %v602, 80
        %v927 = vpop.permute.xlu0 %926
        %v929 = vsel %vm612, %v925, 0
        %v932 = vsel %vm612, %v927, 0
        %934 = vmatprep.subr.bf16.mxu0 0
        %935 = vmatpush1.bf16.xpose.msra.mxu0 %v932
        %936 = vmatprep.subr.bf16.mxu0 0
        %937 = vmatpush1.bf16.xpose.msra.mxu0 0
        %938 = vmatprep.subr.bf16.mxu0 0
        %939 = vmatpush1.bf16.xpose.msra.mxu0 0
        %940 = vmatprep.subr.bf16.mxu0 0
        %941 = vmatpush1.bf16.xpose.msra.mxu0 0
        %942 = vmatprep.subr.bf16.mxu0 0
        %943 = vmatpush1.bf16.xpose.msra.mxu0 0
        %944 = vmatprep.subr.bf16.mxu0 0
        %945 = vmatpush1.bf16.xpose.msra.mxu0 0
        %946 = vmatprep.subr.bf16.mxu0 0
        %947 = vmatpush1.bf16.xpose.msra.mxu0 0
        %948 = vmatprep.subr.bf16.mxu0 0
        %949 = vmatpush1.bf16.xpose.msra.mxu0 0
        %950 = vmatprep.subr.bf16.mxu0 0
        %951 = vmatpush1.bf16.xpose.msra.mxu0 0
        %952 = vmatprep.subr.bf16.mxu0 0
        %953 = vmatpush1.bf16.xpose.msra.mxu0 0
        %954 = vmatprep.subr.bf16.mxu0 0
        %955 = vmatpush1.bf16.xpose.msra.mxu0 0
        %956 = vmatprep.subr.bf16.mxu0 0
        %957 = vmatpush1.bf16.xpose.msra.mxu0 0
        %958 = vmatprep.subr.bf16.mxu0 0
        %959 = vmatpush1.bf16.xpose.msra.mxu0 0
        %960 = vmatprep.subr.bf16.mxu0 0
        %961 = vmatpush1.bf16.xpose.msra.mxu0 0
        %962 = vmatprep.subr.bf16.mxu0 0
        %963 = vmatpush1.bf16.xpose.msra.mxu0 0
        %964 = vmatprep.subr.bf16.mxu0 0
        %965 = vmatpush1.bf16.xpose.msra.mxu0 0
        %966 = vmatprep.mubr.bf16.mxu0 0
        %967 = vmatmul.mubr.bf16.gmra.mrb[0].mxu0 %v929
        %v968 = vpop.f32.mrb[0].mxu0
        %v969 = vadd.f32 %v607, %v968
        %v970 = vpop.f32.mrb[0].mxu0
        %v971 = vpop.f32.mrb[0].mxu0
        %v972 = vpop.f32.mrb[0].mxu0
        %973 = vdwg.mxu0
        %v974 = vsel %vm612, %v969, -inf
        %975 = vmax.xlane.f32.xlu0 %v974
        %v976 = vpop.xlane.xlu0 %975
        %v977 = vsub.f32 %v969, %v976
        %v978 = vmul.f32 %v977, 1.442695
        %v979 = vpow.pop %v978
        %v980 = vsel %vm612, %v979, 0.0
        %981 = vadd.xlane.f32.xlu0 %v980
        %v982 = vpop.xlane.xlu0 %981
        %v983 = vrcp.pop %v982
        %v984 = vmul.f32 %v979, %v983
        %v985 = vpack.c.bf16 %v984, %v984
        %986 = vrot.lane.b32.xlu0 %v602, 48
        %v987 = vpop.permute.xlu0 %986
        %v989 = vsel %vm612, %v985, 0
        %v992 = vsel %vm676, %v987, 0
        %994 = vmatprep.subr.bf16.mxu0 0
        %995 = vmatpush1.bf16.msra.mxu0 %v992
        %996 = vmatprep.subr.bf16.mxu0 0
        %997 = vmatpush1.bf16.msra.mxu0 0
        %998 = vmatprep.subr.bf16.mxu0 0
        %999 = vmatpush1.bf16.msra.mxu0 0
        %1000 = vmatprep.subr.bf16.mxu0 0
        %1001 = vmatpush1.bf16.msra.mxu0 0
        %1002 = vmatprep.subr.bf16.mxu0 0
        %1003 = vmatpush1.bf16.msra.mxu0 0
        %1004 = vmatprep.subr.bf16.mxu0 0
        %1005 = vmatpush1.bf16.msra.mxu0 0
        %1006 = vmatprep.subr.bf16.mxu0 0
        %1007 = vmatpush1.bf16.msra.mxu0 0
        %1008 = vmatprep.subr.bf16.mxu0 0
        %1009 = vmatpush1.bf16.msra.mxu0 0
        %1010 = vmatprep.subr.bf16.mxu0 0
        %1011 = vmatpush1.bf16.msra.mxu0 0
        %1012 = vmatprep.subr.bf16.mxu0 0
        %1013 = vmatpush1.bf16.msra.mxu0 0
        %1014 = vmatprep.subr.bf16.mxu0 0
        %1015 = vmatpush1.bf16.msra.mxu0 0
        %1016 = vmatprep.subr.bf16.mxu0 0
        %1017 = vmatpush1.bf16.msra.mxu0 0
        %1018 = vmatprep.subr.bf16.mxu0 0
        %1019 = vmatpush1.bf16.msra.mxu0 0
        %1020 = vmatprep.subr.bf16.mxu0 0
        %1021 = vmatpush1.bf16.msra.mxu0 0
        %1022 = vmatprep.subr.bf16.mxu0 0
        %1023 = vmatpush1.bf16.msra.mxu0 0
        %1024 = vmatprep.subr.bf16.mxu0 0
        %1025 = vmatpush1.bf16.msra.mxu0 0
        %1026 = vmatprep.mubr.bf16.mxu0 0
        %1027 = vmatmul.mubr.bf16.gmra.mrb[0].mxu0 %v989
        %v1028 = vpop.f32.mrb[0].mxu0
        %v1029 = vadd.f32 0.0, %v1028
        %v1030 = vpop.f32.mrb[0].mxu0
        %v1031 = vpop.f32.mrb[0].mxu0
        %v1032 = vpop.f32.mrb[0].mxu0
        %1033 = vdwg.mxu0
        %v1034 = vpack.c.bf16 %v1029, %v1029
        %v1036 = vsel %vm612, %v1034, 0
        %v1039 = vsel %vm676, %v600, 0
        %1041 = vmatprep.subr.bf16.mxu0 0
        %1042 = vmatpush1.bf16.msra.mxu0 %v1039
        %1043 = vmatprep.subr.bf16.mxu0 0
        %1044 = vmatpush1.bf16.msra.mxu0 0
        %1045 = vmatprep.subr.bf16.mxu0 0
        %1046 = vmatpush1.bf16.msra.mxu0 0
        %1047 = vmatprep.subr.bf16.mxu0 0
        %1048 = vmatpush1.bf16.msra.mxu0 0
        %1049 = vmatprep.subr.bf16.mxu0 0
        %1050 = vmatpush1.bf16.msra.mxu0 0
        %1051 = vmatprep.subr.bf16.mxu0 0
        %1052 = vmatpush1.bf16.msra.mxu0 0
        %1053 = vmatprep.subr.bf16.mxu0 0
        %1054 = vmatpush1.bf16.msra.mxu0 0
        %1055 = vmatprep.subr.bf16.mxu0 0
        %1056 = vmatpush1.bf16.msra.mxu0 0
        %1057 = vmatprep.subr.bf16.mxu0 0
        %1058 = vmatpush1.bf16.msra.mxu0 0
        %1059 = vmatprep.subr.bf16.mxu0 0
        %1060 = vmatpush1.bf16.msra.mxu0 0
        %1061 = vmatprep.subr.bf16.mxu0 0
        %1062 = vmatpush1.bf16.msra.mxu0 0
        %1063 = vmatprep.subr.bf16.mxu0 0
        %1064 = vmatpush1.bf16.msra.mxu0 0
        %1065 = vmatprep.subr.bf16.mxu0 0
        %1066 = vmatpush1.bf16.msra.mxu0 0
        %1067 = vmatprep.subr.bf16.mxu0 0
        %1068 = vmatpush1.bf16.msra.mxu0 0
        %1069 = vmatprep.subr.bf16.mxu0 0
        %1070 = vmatpush1.bf16.msra.mxu0 0
        %1071 = vmatprep.subr.bf16.mxu0 0
        %1072 = vmatpush1.bf16.msra.mxu0 0
        %1073 = vmatprep.mubr.bf16.mxu0 0
        %1074 = vmatmul.mubr.bf16.gmra.mrb[0].mxu0 %v1036
        %v1075 = vpop.f32.mrb[0].mxu0
        %v1076 = vadd.f32 0.0, %v1075
        %v1077 = vpop.f32.mrb[0].mxu0
        %v1078 = vpop.f32.mrb[0].mxu0
        %v1079 = vpop.f32.mrb[0].mxu0
        %1080 = vdwg.mxu0
        %v1081 = vadd.f32 %v919, %v1076
        %1082 = vrot.lane.b32.xlu0 %v602, 104
        %v1083 = vpop.permute.xlu0 %1082
        %1084 = vrot.lane.b32.xlu0 %v602, 72
        %v1085 = vpop.permute.xlu0 %1084
        %v1087 = vsel %vm612, %v1083, 0
        %v1090 = vsel %vm612, %v1085, 0
        %1092 = vmatprep.subr.bf16.mxu0 0
        %1093 = vmatpush1.bf16.xpose.msra.mxu0 %v1090
        %1094 = vmatprep.subr.bf16.mxu0 0
        %1095 = vmatpush1.bf16.xpose.msra.mxu0 0
        %1096 = vmatprep.subr.bf16.mxu0 0
        %1097 = vmatpush1.bf16.xpose.msra.mxu0 0
        %1098 = vmatprep.subr.bf16.mxu0 0
        %1099 = vmatpush1.bf16.xpose.msra.mxu0 0
        %1100 = vmatprep.subr.bf16.mxu0 0
        %1101 = vmatpush1.bf16.xpose.msra.mxu0 0
        %1102 = vmatprep.subr.bf16.mxu0 0
        %1103 = vmatpush1.bf16.xpose.msra.mxu0 0
        %1104 = vmatprep.subr.bf16.mxu0 0
        %1105 = vmatpush1.bf16.xpose.msra.mxu0 0
        %1106 = vmatprep.subr.bf16.mxu0 0
        %1107 = vmatpush1.bf16.xpose.msra.mxu0 0
        %1108 = vmatprep.subr.bf16.mxu0 0
        %1109 = vmatpush1.bf16.xpose.msra.mxu0 0
        %1110 = vmatprep.subr.bf16.mxu0 0
        %1111 = vmatpush1.bf16.xpose.msra.mxu0 0
        %1112 = vmatprep.subr.bf16.mxu0 0
        %1113 = vmatpush1.bf16.xpose.msra.mxu0 0
        %1114 = vmatprep.subr.bf16.mxu0 0
        %1115 = vmatpush1.bf16.xpose.msra.mxu0 0
        %1116 = vmatprep.subr.bf16.mxu0 0
        %1117 = vmatpush1.bf16.xpose.msra.mxu0 0
        %1118 = vmatprep.subr.bf16.mxu0 0
        %1119 = vmatpush1.bf16.xpose.msra.mxu0 0
        %1120 = vmatprep.subr.bf16.mxu0 0
        %1121 = vmatpush1.bf16.xpose.msra.mxu0 0
        %1122 = vmatprep.subr.bf16.mxu0 0
        %1123 = vmatpush1.bf16.xpose.msra.mxu0 0
        %1124 = vmatprep.mubr.bf16.mxu0 0
        %1125 = vmatmul.mubr.bf16.gmra.mrb[0].mxu0 %v1087
        %v1126 = vpop.f32.mrb[0].mxu0
        %v1127 = vadd.f32 %v607, %v1126
        %v1128 = vpop.f32.mrb[0].mxu0
        %v1129 = vpop.f32.mrb[0].mxu0
        %v1130 = vpop.f32.mrb[0].mxu0
        %1131 = vdwg.mxu0
        %v1132 = vsel %vm612, %v1127, -inf
        %1133 = vmax.xlane.f32.xlu0 %v1132
        %v1134 = vpop.xlane.xlu0 %1133
        %v1135 = vsub.f32 %v1127, %v1134
        %v1136 = vmul.f32 %v1135, 1.442695
        %v1137 = vpow.pop %v1136
        %v1138 = vsel %vm612, %v1137, 0.0
        %1139 = vadd.xlane.f32.xlu0 %v1138
        %v1140 = vpop.xlane.xlu0 %1139
        %v1141 = vrcp.pop %v1140
        %v1142 = vmul.f32 %v1137, %v1141
        %v1143 = vpack.c.bf16 %v1142, %v1142
        %1144 = vrot.lane.b32.xlu0 %v602, 40
        %v1145 = vpop.permute.xlu0 %1144
        %v1147 = vsel %vm612, %v1143, 0
        %v1150 = vsel %vm676, %v1145, 0
        %1152 = vmatprep.subr.bf16.mxu0 0
        %1153 = vmatpush1.bf16.msra.mxu0 %v1150
        %1154 = vmatprep.subr.bf16.mxu0 0
        %1155 = vmatpush1.bf16.msra.mxu0 0
        %1156 = vmatprep.subr.bf16.mxu0 0
        %1157 = vmatpush1.bf16.msra.mxu0 0
        %1158 = vmatprep.subr.bf16.mxu0 0
        %1159 = vmatpush1.bf16.msra.mxu0 0
        %1160 = vmatprep.subr.bf16.mxu0 0
        %1161 = vmatpush1.bf16.msra.mxu0 0
        %1162 = vmatprep.subr.bf16.mxu0 0
        %1163 = vmatpush1.bf16.msra.mxu0 0
        %1164 = vmatprep.subr.bf16.mxu0 0
        %1165 = vmatpush1.bf16.msra.mxu0 0
        %1166 = vmatprep.subr.bf16.mxu0 0
        %1167 = vmatpush1.bf16.msra.mxu0 0
        %1168 = vmatprep.subr.bf16.mxu0 0
        %1169 = vmatpush1.bf16.msra.mxu0 0
        %1170 = vmatprep.subr.bf16.mxu0 0
        %1171 = vmatpush1.bf16.msra.mxu0 0
        %1172 = vmatprep.subr.bf16.mxu0 0
        %1173 = vmatpush1.bf16.msra.mxu0 0
        %1174 = vmatprep.subr.bf16.mxu0 0
        %1175 = vmatpush1.bf16.msra.mxu0 0
        %1176 = vmatprep.subr.bf16.mxu0 0
        %1177 = vmatpush1.bf16.msra.mxu0 0
        %1178 = vmatprep.subr.bf16.mxu0 0
        %1179 = vmatpush1.bf16.msra.mxu0 0
        %1180 = vmatprep.subr.bf16.mxu0 0
        %1181 = vmatpush1.bf16.msra.mxu0 0
        %1182 = vmatprep.subr.bf16.mxu0 0
        %1183 = vmatpush1.bf16.msra.mxu0 0
        %1184 = vmatprep.mubr.bf16.mxu0 0
        %1185 = vmatmul.mubr.bf16.gmra.mrb[0].mxu0 %v1147
        %v1186 = vpop.f32.mrb[0].mxu0
        %v1187 = vadd.f32 0.0, %v1186
        %v1188 = vpop.f32.mrb[0].mxu0
        %v1189 = vpop.f32.mrb[0].mxu0
        %v1190 = vpop.f32.mrb[0].mxu0
        %1191 = vdwg.mxu0
        %v1192 = vpack.c.bf16 %v1187, %v1187
        %v1194 = vsel %vm612, %v1192, 0
        %v1197 = vsel %vm676, %v601, 0
        %1199 = vmatprep.subr.bf16.mxu0 0
        %1200 = vmatpush1.bf16.msra.mxu0 %v1197
        %1201 = vmatprep.subr.bf16.mxu0 0
        %1202 = vmatpush1.bf16.msra.mxu0 0
        %1203 = vmatprep.subr.bf16.mxu0 0
        %1204 = vmatpush1.bf16.msra.mxu0 0
        %1205 = vmatprep.subr.bf16.mxu0 0
        %1206 = vmatpush1.bf16.msra.mxu0 0
        %1207 = vmatprep.subr.bf16.mxu0 0
        %1208 = vmatpush1.bf16.msra.mxu0 0
        %1209 = vmatprep.subr.bf16.mxu0 0
        %1210 = vmatpush1.bf16.msra.mxu0 0
        %1211 = vmatprep.subr.bf16.mxu0 0
        %1212 = vmatpush1.bf16.msra.mxu0 0
        %1213 = vmatprep.subr.bf16.mxu0 0
        %1214 = vmatpush1.bf16.msra.mxu0 0
        %1215 = vmatprep.subr.bf16.mxu0 0
        %1216 = vmatpush1.bf16.msra.mxu0 0
        %1217 = vmatprep.subr.bf16.mxu0 0
        %1218 = vmatpush1.bf16.msra.mxu0 0
        %1219 = vmatprep.subr.bf16.mxu0 0
        %1220 = vmatpush1.bf16.msra.mxu0 0
        %1221 = vmatprep.subr.bf16.mxu0 0
        %1222 = vmatpush1.bf16.msra.mxu0 0
        %1223 = vmatprep.subr.bf16.mxu0 0
        %1224 = vmatpush1.bf16.msra.mxu0 0
        %1225 = vmatprep.subr.bf16.mxu0 0
        %1226 = vmatpush1.bf16.msra.mxu0 0
        %1227 = vmatprep.subr.bf16.mxu0 0
        %1228 = vmatpush1.bf16.msra.mxu0 0
        %1229 = vmatprep.subr.bf16.mxu0 0
        %1230 = vmatpush1.bf16.msra.mxu0 0
        %1231 = vmatprep.mubr.bf16.mxu0 0
        %1232 = vmatmul.mubr.bf16.gmra.mrb[0].mxu0 %v1194
        %v1233 = vpop.f32.mrb[0].mxu0
        %v1234 = vadd.f32 0.0, %v1233
        %v1235 = vpop.f32.mrb[0].mxu0
        %v1236 = vpop.f32.mrb[0].mxu0
        %v1237 = vpop.f32.mrb[0].mxu0
        %1238 = vdwg.mxu0
        %v1239 = vadd.f32 %v1081, %v1234
        %s1240 = scalar_lea.vmem %s5, %s31
        %v1241 = vld [vmem:[%s1240] sm:$0x1]
        %v1243 = vlaneseq
        %v1244 = vshrl.u32 %v1243, 7
        %v1245 = vsub.s32 0, %v1244
        %v1246 = vrot.slane %v1241, %v1245
        %v1248 = vadd.f32 %v1239, %v1246
        %v1249 = vadd.f32 %v522, %v1248
        %s1250 = scalar_lea.vmem %s10, %s31
        %v1251 = vld [vmem:[%s1250] sm:$0x1]
        %s1252 = scalar_lea.vmem %s11, %s31
        %v1253 = vld [vmem:[%s1252] sm:$0x1]
        %v1254 = vsel %vm552, %v1249, 0.0
        %1255 = vadd.xlane.f32.xlu0 %v1254
        %v1256 = vpop.xlane.xlu0 %1255
        %v1257 = vrcp.pop 32.0
        %v1258 = vmul.f32 %v1256, %v1257
        %v1259 = vsub.f32 %v1249, %v1258
        %v1260 = vmul.f32 %v1259, %v1259
        %v1261 = vsel %vm552, %v1260, 0.0
        %1262 = vadd.xlane.f32.xlu0 %v1261
        %v1263 = vpop.xlane.xlu0 %1262
        %v1264 = vmul.f32 %v1263, %v1257
        %v1265 = vadd.f32 %v1264, 1e-12
        %v1266 = vrsqrt.pop %v1265
        %v1267 = vmul.f32 %v1259, %v1266
        %v1269 = vlaneseq
        %v1270 = vshrl.u32 %v1269, 7
        %v1271 = vsub.s32 0, %v1270
        %v1272 = vrot.slane %v1251, %v1271
        %v1274 = vmul.f32 %v1267, %v1272
        %v1276 = vlaneseq
        %v1277 = vshrl.u32 %v1276, 7
        %v1278 = vsub.s32 0, %v1277
        %v1279 = vrot.slane %v1253, %v1278
        %v1281 = vadd.f32 %v1274, %v1279
        %v1282 = vpack.c.bf16 %v1281, %v1281
        %s1283 = smul.addr %s525, 4
        %s1284 = scalar_lea.vmem [#allocation3], %s1283
        %v1285 = vld [vmem:[%s1284] sm:$0xf]
        %v1286 = vld [vmem:[%s1284 + $0x4] sm:$0xf]
        %v1287 = vld [vmem:[%s1284 + $0x8] sm:$0xf]
        %v1288 = vld [vmem:[%s1284 + $0xc] sm:$0xf]
        %s1289 = scalar_lea.vmem %s7, %s31
        %v1290 = vld [vmem:[%s1289] sm:$0x1]
        %v1292 = vlaneseq
        %v1293 = vshrl.u32 %v1292, 7
        %v1294 = vsub.s32 0, %v1293
        %v1295 = vrot.slane %v1290, %v1294
        %v1301 = vunpack.c.l.b16 %v1285
        %v1302 = vunpack.c.l.b16 %v1286
        %v1303 = vunpack.c.l.b16 %v1287
        %v1304 = vunpack.c.l.b16 %v1288
        %v1305 = vpack.c.b16 %v1302, %v1301
        %v1306 = vpack.c.b16 %v1304, %v1303
        %v1310 = vsel %vm552, %v1282, 0
        %1312 = vmatprep.subr.bf16.mxu0 0
        %1313 = vmatpush1.bf16.msra.mxu0 %v1305
        %1314 = vmatprep.subr.bf16.mxu0 0
        %1315 = vmatpush1.bf16.msra.mxu0 %v1306
        %1316 = vmatprep.subr.bf16.mxu0 0
        %1317 = vmatpush1.bf16.msra.mxu0 0
        %1318 = vmatprep.subr.bf16.mxu0 0
        %1319 = vmatpush1.bf16.msra.mxu0 0
        %1320 = vmatprep.subr.bf16.mxu0 0
        %1321 = vmatpush1.bf16.msra.mxu0 0
        %1322 = vmatprep.subr.bf16.mxu0 0
        %1323 = vmatpush1.bf16.msra.mxu0 0
        %1324 = vmatprep.subr.bf16.mxu0 0
        %1325 = vmatpush1.bf16.msra.mxu0 0
        %1326 = vmatprep.subr.bf16.mxu0 0
        %1327 = vmatpush1.bf16.msra.mxu0 0
        %1328 = vmatprep.subr.bf16.mxu0 0
        %1329 = vmatpush1.bf16.msra.mxu0 0
        %1330 = vmatprep.subr.bf16.mxu0 0
        %1331 = vmatpush1.bf16.msra.mxu0 0
        %1332 = vmatprep.subr.bf16.mxu0 0
        %1333 = vmatpush1.bf16.msra.mxu0 0
        %1334 = vmatprep.subr.bf16.mxu0 0
        %1335 = vmatpush1.bf16.msra.mxu0 0
        %1336 = vmatprep.subr.bf16.mxu0 0
        %1337 = vmatpush1.bf16.msra.mxu0 0
        %1338 = vmatprep.subr.bf16.mxu0 0
        %1339 = vmatpush1.bf16.msra.mxu0 0
        %1340 = vmatprep.subr.bf16.mxu0 0
        %1341 = vmatpush1.bf16.msra.mxu0 0
        %1342 = vmatprep.subr.bf16.mxu0 0
        %1343 = vmatpush1.bf16.msra.mxu0 0
        %1344 = vmatprep.mubr.bf16.mxu0 0
        %1345 = vmatmul.mubr.bf16.gmra.mrb[0].mxu0 %v1310
        %v1346 = vpop.f32.mrb[0].mxu0
        %v1347 = vadd.f32 %v1295, %v1346
        %v1348 = vpop.f32.mrb[0].mxu0
        %v1349 = vpop.f32.mrb[0].mxu0
        %v1350 = vpop.f32.mrb[0].mxu0
        %1351 = vdwg.mxu0
        %v1352 = vmul.f32 %v1347, 0.5
        %v1353 = vmul.f32 %v1347, 0.044715
        %v1354 = vmul.f32 %v1353, %v1347
        %v1355 = vmul.f32 %v1354, %v1347
        %v1356 = vadd.f32 %v1347, %v1355
        %v1357 = vmul.f32 %v1356, 0.7978846
        %v1358 = vtanh.pop %v1357
        %v1359 = vadd.f32 %v1358, 1.0
        %v1360 = vmul.f32 %v1352, %v1359
        %v1361 = vpack.c.bf16 %v1360, %v1360
        %s1362 = smul.u32 %s31, 8
        %s1363 = smul.addr %s1362, 4
        %s1364 = scalar_lea.vmem %s8, %s1363
        %v1365 = vld [vmem:[%s1364] sm:$0xf]
        %v1366 = vld [vmem:[%s1364 + $0x4] sm:$0xf]
        %v1367 = vld [vmem:[%s1364 + $0x8] sm:$0xf]
        %v1368 = vld [vmem:[%s1364 + $0xc] sm:$0xf]
        %v1369 = vld [vmem:[%s1364 + $0x10] sm:$0xf]
        %v1370 = vld [vmem:[%s1364 + $0x14] sm:$0xf]
        %v1371 = vld [vmem:[%s1364 + $0x18] sm:$0xf]
        %v1372 = vld [vmem:[%s1364 + $0x1c] sm:$0xf]
        %s1373 = scalar_lea.vmem %s9, %s31
        %v1374 = vld [vmem:[%s1373] sm:$0x1]
        %v1376 = vlaneseq
        %v1377 = vshrl.u32 %v1376, 7
        %v1378 = vsub.s32 0, %v1377
        %v1379 = vrot.slane %v1374, %v1378
        %v1389 = vunpack.c.l.b16 %v1365
        %v1390 = vunpack.c.l.b16 %v1366
        %v1391 = vunpack.c.l.b16 %v1367
        %v1392 = vunpack.c.l.b16 %v1368
        %v1393 = vunpack.c.l.b16 %v1369
        %v1394 = vunpack.c.l.b16 %v1370
        %v1395 = vunpack.c.l.b16 %v1371
        %v1396 = vunpack.c.l.b16 %v1372
        %v1397 = vpack.c.b16 %v1390, %v1389
        %v1398 = vpack.c.b16 %v1392, %v1391
        %v1399 = vpack.c.b16 %v1394, %v1393
        %v1400 = vpack.c.b16 %v1396, %v1395
        %vm1405 = vcmask 523264
        %v1407 = vsel %vm1405, %v1361, 0
        %1409 = vmatprep.subr.bf16.mxu0 0
        %1410 = vmatpush1.bf16.msra.mxu0 %v1397
        %1411 = vmatprep.subr.bf16.mxu0 0
        %1412 = vmatpush1.bf16.msra.mxu0 %v1398
        %1413 = vmatprep.subr.bf16.mxu0 0
        %1414 = vmatpush1.bf16.msra.mxu0 %v1399
        %1415 = vmatprep.subr.bf16.mxu0 0
        %1416 = vmatpush1.bf16.msra.mxu0 %v1400
        %1417 = vmatprep.subr.bf16.mxu0 0
        %1418 = vmatpush1.bf16.msra.mxu0 0
        %1419 = vmatprep.subr.bf16.mxu0 0
        %1420 = vmatpush1.bf16.msra.mxu0 0
        %1421 = vmatprep.subr.bf16.mxu0 0
        %1422 = vmatpush1.bf16.msra.mxu0 0
        %1423 = vmatprep.subr.bf16.mxu0 0
        %1424 = vmatpush1.bf16.msra.mxu0 0
        %1425 = vmatprep.subr.bf16.mxu0 0
        %1426 = vmatpush1.bf16.msra.mxu0 0
        %1427 = vmatprep.subr.bf16.mxu0 0
        %1428 = vmatpush1.bf16.msra.mxu0 0
        %1429 = vmatprep.subr.bf16.mxu0 0
        %1430 = vmatpush1.bf16.msra.mxu0 0
        %1431 = vmatprep.subr.bf16.mxu0 0
        %1432 = vmatpush1.bf16.msra.mxu0 0
        %1433 = vmatprep.subr.bf16.mxu0 0
        %1434 = vmatpush1.bf16.msra.mxu0 0
        %1435 = vmatprep.subr.bf16.mxu0 0
        %1436 = vmatpush1.bf16.msra.mxu0 0
        %1437 = vmatprep.subr.bf16.mxu0 0
        %1438 = vmatpush1.bf16.msra.mxu0 0
        %1439 = vmatprep.subr.bf16.mxu0 0
        %1440 = vmatpush1.bf16.msra.mxu0 0
        %1441 = vmatprep.mubr.bf16.mxu0 0
        %1442 = vmatmul.mubr.bf16.gmra.mrb[0].mxu0 %v1407
        %v1443 = vpop.f32.mrb[0].mxu0
        %v1444 = vadd.f32 %v1379, %v1443
        %v1445 = vpop.f32.mrb[0].mxu0
        %v1446 = vpop.f32.mrb[0].mxu0
        %v1447 = vpop.f32.mrb[0].mxu0
        %1448 = vdwg.mxu0
        %v1449 = vadd.f32 %v1281, %v1444
        %s1450 = scalar_lea.vmem %s12, %s31
        %v1451 = vld [vmem:[%s1450] sm:$0x1]
        %s1452 = scalar_lea.vmem %s13, %s31
        %v1453 = vld [vmem:[%s1452] sm:$0x1]
        %v1454 = vsel %vm552, %v1449, 0.0
        %1455 = vadd.xlane.f32.xlu0 %v1454
        %v1456 = vpop.xlane.xlu0 %1455
        %v1457 = vmul.f32 %v1456, %v1257
        %v1458 = vsub.f32 %v1449, %v1457
        %v1459 = vmul.f32 %v1458, %v1458
        %v1460 = vsel %vm552, %v1459, 0.0
        %1461 = vadd.xlane.f32.xlu0 %v1460
        %v1462 = vpop.xlane.xlu0 %1461
        %v1463 = vmul.f32 %v1462, %v1257
        %v1464 = vadd.f32 %v1463, 1e-12
        %v1465 = vrsqrt.pop %v1464
        %v1466 = vmul.f32 %v1458, %v1465
        %v1468 = vlaneseq
        %v1469 = vshrl.u32 %v1468, 7
        %v1470 = vsub.s32 0, %v1469
        %v1471 = vrot.slane %v1451, %v1470
        %v1473 = vmul.f32 %v1466, %v1471
        %v1475 = vlaneseq
        %v1476 = vshrl.u32 %v1475, 7
        %v1477 = vsub.s32 0, %v1476
        %v1478 = vrot.slane %v1453, %v1477
        %v1480 = vadd.f32 %v1473, %v1478
        %1481 = vst.msk [vmem:[#allocation2] sm:$0xff] %vm552, %v1480
        %1482 = vst.msk [vmem:[%s513] sm:$0xff] %vm552, %v1480
        %p1483 = scmp.lt.s32.totalorder %s31, 1
        %s1484 = scalar_select %p1483, %s31, 1
        %p1485 = scmp.lt.s32.totalorder %s30, 1
        %s1486 = scalar_select %p1485, %s30, 1
        %s1487 = smul.addr %s1484, 2
        %s1488 = sadd.s32 %s1486, %s1487
        %s1489 = smul.addr %s1488, 8
        %s1490 = scalar_lea.vmem %s14, %s1489
        // Predicated region
        $region85: #{ext_bert_encoder_forward.1} parent=75 // pred_check
          %p1491 = pneg %p362
        $region86: #{ext_bert_encoder_forward.1} parent=75 // pred_check_branch
          %1493 = sbr.rel (%p1491) target = $region88
        $region87: #{ext_bert_encoder_forward.1} parent=75 // pred_region
          _
        $region88: #{ext_bert_encoder_forward.1} parent=75 // pred_fallthru
          _
      $region76: #{ext_bert_encoder_forward.1} parent=5 // pred_fallthru
        _
      %p1494 = scmp.le.s32.totalorder 2, %s21
      // Predicated region
      $region89: #{ext_bert_encoder_forward.1} parent=5 // pred_check
        %p1495 = pneg %p1494
      $region90: #{ext_bert_encoder_forward.1} parent=5 // pred_check_branch
        %1497 = sbr.rel (%p1495) target = $region92
      $region91: #{ext_bert_encoder_forward.1} parent=5 // pred_region
        %s1498 = ssub.s32 %s21, 2
        // Predicated region
        $region93: #{ext_bert_encoder_forward.1} parent=91 // pred_check
          %p1499 = pneg %p368
        $region94: #{ext_bert_encoder_forward.1} parent=91 // pred_check_branch
          %1501 = sbr.rel (%p1499) target = $region96
        $region95: #{ext_bert_encoder_forward.1} parent=91 // pred_region
          %p1502 = scmp.lt.s32.totalorder %s33, 1
          %s1503 = scalar_select %p1502, %s33, 1
          %p1504 = scmp.lt.s32.totalorder %s32, 1
          %s1505 = scalar_select %p1504, %s32, 1
          %s1506 = smul.addr %s1503, 2
          %s1507 = sadd.s32 %s1505, %s1506
          %s1508 = smul.addr %s1507, 8
          %s1509 = scalar_lea.vmem %s14, %s1508
        $region96: #{ext_bert_encoder_forward.1} parent=91 // pred_fallthru
          _
      $region92: #{ext_bert_encoder_forward.1} parent=5 // pred_fallthru
        _
    $region6: #{ext_bert_encoder_forward.1} parent=1 // loop_footer
      %s25 = sadd.s32 1, %s21
    $region7: #{ext_bert_encoder_forward.1} parent=1 // loop_footer_branch
      %20 = sbr.rel target = $region3
    $region8: #{ext_bert_encoder_forward.1} parent=1 // loop_exit
      _
    %1510 = vsyncpa [#allocation4], 1
    %s1511 = scalar_lea.sflag [#allocation4], 1
    %1512 = vsyncpa %s1511, 1

</llo_original>
